<compile_context>
chip_gen: v7x
topology: tpu7x:2x2x1
jax: 0.10.0
libtpu: 0.0.40
codegen_flags: <defaults>
</compile_context>

<pallas_src>
import functools

import jax
import jax.numpy as jnp
from jax import lax
from jax.experimental import pallas as pl
from jax.experimental.pallas import tpu as pltpu


# ----------------------------------------------------------------------------
# Spectral norm (power iteration, num_svs=1, num_itrs=1) — tiny scalar/vector
# work, kept in plain JAX glue exactly as SN.W_() does.
# ----------------------------------------------------------------------------
def spectral_normalize(w4, u, eps=1e-12):
    """w4: (out, in, 1, 1) conv1x1 weight, u: (1, out) buffer -> (out, in)/sv."""
    W = w4.reshape(w4.shape[0], -1)                     # (out, in)
    v = u @ W                                           # (1, in)
    v = v / jnp.maximum(jnp.linalg.norm(v), eps)        # F.normalize
    u_new = v @ W.T                                     # (1, out)
    u_new = u_new / jnp.maximum(jnp.linalg.norm(u_new), eps)
    sv = jnp.squeeze(v @ W.T @ u_new.T)                 # scalar singular value
    return W / sv


# ----------------------------------------------------------------------------
# Kernel body.
# ----------------------------------------------------------------------------
def _attention_body(x_tile_ref, x_full_ref, wq_ref, wphi_ref, wg_ref, wo_ref,
                    out_ref, phi_t_ref, g_ref, *, hwp, compute_dtype,
                    approx_recip):
    # x_tile_ref : (1, tq, Cpad)  compute dtype — query slice + residual
    # x_full_ref : (1, HW, Cpad)  compute dtype — resident per batch (pool only)
    # wq_ref     : (Cpad, C8)     theta weight (transposed, zero-padded rows)
    # wphi_ref   : (C8, Cpad)     phi weight   (zero-padded cols)
    # wg_ref     : (Cpad, C2)     g weight     (transposed, zero-padded rows)
    # wo_ref     : (C2, Cpad)     gamma * o-weight (transposed, zero-padded cols)
    # out_ref    : (1, tq, Cpad)  f32
    # phi_t_ref  : (C8, HWp)      VMEM scratch (pooled phi, transposed)
    # g_ref      : (HWp, C2)      VMEM scratch (pooled g)
    qq = pl.program_id(2)

    def compute_pool():
        # 2x2 max-pool == max over the 4 member-major slabs; projections are
        # done per slab with a running max (no (HW, Cp) intermediate).
        def slab(i):
            xs = x_full_ref[0, pl.ds(i * hwp, hwp), :]          # (hwp, Cpad)
            # (C8, Cpad) x (hwp, Cpad) contracted on Cpad -> (C8, hwp); the
            # only transposed contraction, done once per batch / q-split.
            phi_t_i = lax.dot_general(wphi_ref[...], xs,
                                      (((1,), (1,)), ((), ())),
                                      preferred_element_type=jnp.float32)
            g_i = jnp.dot(xs, wg_ref[...],
                          preferred_element_type=jnp.float32)   # (hwp, C2)
            return phi_t_i, g_i

        phi_t, g_p = slab(0)
        for i in range(1, 4):
            p_i, g_i = slab(i)
            phi_t = jnp.maximum(phi_t, p_i)
            g_p = jnp.maximum(g_p, g_i)
        phi_t_ref[...] = phi_t.astype(compute_dtype)             # (C8, HWp)
        g_ref[...] = g_p.astype(compute_dtype)                   # (HWp, C2)

    pl.when(qq == 0)(compute_pool)

    # ---- per-query-tile attention (all plain (M,K)@(K,N) matmuls) ----------
    xq = x_tile_ref[0]                                           # (tq, Cpad)
    theta = jnp.dot(xq, wq_ref[...],
                    preferred_element_type=jnp.float32)          # (tq, C8)
    logits = jnp.dot(theta.astype(compute_dtype), phi_t_ref[...],
                     preferred_element_type=jnp.float32)         # (tq, HWp)

    # Stable softmax with deferred normalization.
    logits = logits - jnp.max(logits, axis=-1, keepdims=True)
    e = jnp.exp(logits)                                          # f32
    denom = jnp.sum(e, axis=-1, keepdims=True)                   # (tq, 1)

    attn = jnp.dot(e.astype(compute_dtype), g_ref[...],
                   preferred_element_type=jnp.float32)           # (tq, C2)
    attn = attn * pl.reciprocal(denom, approx=approx_recip)      # EUP recip

    o = jnp.dot(attn.astype(compute_dtype), wo_ref[...],
                preferred_element_type=jnp.float32)              # (tq, Cpad)
    out_ref[0] = (o + xq.astype(jnp.float32)).astype(out_ref.dtype)


def _make_kernel(single_x, **kw):
    body = functools.partial(_attention_body, **kw)
    if single_x:
        def kernel(x_ref, wq, wphi, wg, wo, out_ref, phi_t, g):
            body(x_ref, x_ref, wq, wphi, wg, wo, out_ref, phi_t, g)
    else:
        def kernel(xt, xf, wq, wphi, wg, wo, out_ref, phi_t, g):
            body(xt, xf, wq, wphi, wg, wo, out_ref, phi_t, g)
    return kernel


# ----------------------------------------------------------------------------
# Wrapper helpers.
# ----------------------------------------------------------------------------
def _choose_tq(hw, target=512):
    """Query-tile size: prefer multiples of 128, then of 8, that divide HW."""
    if hw <= target:
        return hw
    m128 = max((t for t in range(128, target + 1, 128) if hw % t == 0),
               default=None)
    if m128 is not None:
        return m128
    m8 = max((t for t in range(8, target + 1, 8) if hw % t == 0), default=None)
    if m8 is not None:
        return m8
    # TODO(synk): pad the query axis when HW has no multiple-of-8 divisor.
    return hw


def _vmem_limit_bytes(HW, HWp, Cpad, C8, C2, tq, isz, single_x):
    """Shape-aware VMEM limit, clamped to ~7/8 of the chip's physical VMEM."""
    x_full = HW * Cpad * isz * 2                    # double-buffered resident x
    x_tile = 0 if single_x else tq * Cpad * isz * 2
    out = tq * Cpad * 4 * 2
    weights = (2 * Cpad * C8 + Cpad * C2 + C2 * Cpad) * isz * 2
    scratch = (C8 * HWp + HWp * C2) * isz
    pool_tmp = HWp * (C8 + C2) * 4 * 2 + HWp * Cpad * isz
    tile_tmp = tq * HWp * 4 * 2 + tq * (C8 + C2 + Cpad) * 4
    total = x_full + x_tile + out + weights + scratch + pool_tmp + tile_tmp
    try:
        phys = pltpu.get_tpu_info().vmem_capacity_bytes
    except Exception:
        phys = 64 * 1024 * 1024                     # v7x per-TC minimum
    cap = phys * 7 // 8
    return int(max(32 * 1024 * 1024, min(2 * total + (4 << 20), cap)))


def attention_pallas(x_nchw, w_theta, w_phi, w_g, w_o, gamma,
                     *, tq=None, use_bf16=True, q_splits=1):
    """x_nchw: (B, C, H, W) f32; weights are spectrally-normalized 2D matrices.

    q_splits: number of independent query-range splits per batch element
    (the pool is recomputed once per split). Keep 1 on single-TensorCore
    chips (v5e/v6e); use 2 on v7x when B == 1 to keep both cores busy.
    """
    B, C, H, W = x_nchw.shape
    assert H % 2 == 0 and W % 2 == 0, "2x2 max-pool needs even H, W"
    HW = H * W
    HWp = HW // 4
    C8, C2 = w_theta.shape[0], w_g.shape[0]
    Cpad = ((C + 127) // 128) * 128                 # lane-dense channel padding
    compute_dtype = jnp.bfloat16 if use_bf16 else jnp.float32
    isz = 2 if use_bf16 else 4

    if tq is None:
        tq = _choose_tq(HW)
    assert HW % tq == 0, "tq must divide H*W"
    n_q = HW // tq
    if q_splits < 1 or n_q % q_splits != 0:
        q_splits = 1
    n_q_inner = n_q // q_splits
    single_x = (n_q == 1 and q_splits == 1)

    # Member-major token layout: token = (dh*2 + dw)*HWp + (hp*(W//2)+wp), so
    # the 2x2 max-pool of phi/g is a max over 4 contiguous HWp-row slabs.
    x_cl = jnp.transpose(x_nchw, (0, 2, 3, 1))                    # (B, H, W, C)
    x_perm = (x_cl.reshape(B, H // 2, 2, W // 2, 2, C)
                  .transpose(0, 2, 4, 1, 3, 5)
                  .reshape(B, HW, C))
    if Cpad != C:
        x_perm = jnp.pad(x_perm, ((0, 0), (0, 0), (0, Cpad - C)))
    x_perm = x_perm.astype(compute_dtype)

    # Weights: input channels zero-padded to Cpad; oriented so every per-tile
    # matmul is plain NN; gamma folded into the output projection.
    def pad_in(w):                                                # (out, C)
        return jnp.pad(w, ((0, 0), (0, Cpad - C))) if Cpad != C else w

    wq_t = pad_in(w_theta).T.astype(compute_dtype)                # (Cpad, C8)
    wphi = pad_in(w_phi).astype(compute_dtype)                    # (C8, Cpad)
    wg_t = pad_in(w_g).T.astype(compute_dtype)                    # (Cpad, C2)
    wo_t = (jnp.asarray(gamma, jnp.float32) * w_o).T              # (C2, C)
    if Cpad != C:
        wo_t = jnp.pad(wo_t, ((0, 0), (0, Cpad - C)))
    wo_t = wo_t.astype(compute_dtype)                             # (C2, Cpad)

    kernel = _make_kernel(single_x, hwp=HWp, compute_dtype=compute_dtype,
                          approx_recip=use_bf16)

    def out_map(b, s, q):
        return (b, s * n_q_inner + q, 0)

    x_full_spec = pl.BlockSpec((1, HW, Cpad), lambda b, s, q: (b, 0, 0))
    x_tile_spec = pl.BlockSpec((1, tq, Cpad), out_map)
    w_spec = lambda shape: pl.BlockSpec(shape, lambda b, s, q: (0, 0))
    weight_specs = [w_spec((Cpad, C8)), w_spec((C8, Cpad)),
                    w_spec((Cpad, C2)), w_spec((C2, Cpad))]

    if single_x:
        in_specs = [x_full_spec] + weight_specs
        args = (x_perm, wq_t, wphi, wg_t, wo_t)
    else:
        in_specs = [x_tile_spec, x_full_spec] + weight_specs
        args = (x_perm, x_perm, wq_t, wphi, wg_t, wo_t)

    vmem_limit = _vmem_limit_bytes(HW, HWp, Cpad, C8, C2, tq, isz, single_x)

    grid_spec = pltpu.PrefetchScalarGridSpec(
        num_scalar_prefetch=0,
        grid=(B, q_splits, n_q_inner),
        in_specs=in_specs,
        out_specs=pl.BlockSpec((1, tq, Cpad), out_map),
        scratch_shapes=[pltpu.VMEM((C8, HWp), compute_dtype),
                        pltpu.VMEM((HWp, C2), compute_dtype)],
    )

    out_perm = pl.pallas_call(
        kernel,
        out_shape=jax.ShapeDtypeStruct((B, HW, Cpad), jnp.float32),
        grid_spec=grid_spec,
        compiler_params=pltpu.CompilerParams(
            dimension_semantics=("parallel", "parallel", "arbitrary"),
            vmem_limit_bytes=vmem_limit),
    )(*args)

    # Undo the member-major permutation, drop channel padding, return NCHW.
    out_cl = (out_perm.reshape(B, 2, 2, H // 2, W // 2, Cpad)
                      .transpose(0, 3, 1, 4, 2, 5)
                      .reshape(B, H, W, Cpad))[..., :C]
    return out_cl.transpose(0, 3, 1, 2)


# ----------------------------------------------------------------------------
# Pure-JAX reference (mirrors the PyTorch forward in NCHW) for verification.
# ----------------------------------------------------------------------------
def attention_ref(x, w_theta, w_phi, w_g, w_o, gamma):
    B, C, H, W = x.shape
    C8, C2 = w_theta.shape[0], w_g.shape[0]

    def conv1x1(t, w):
        return jnp.einsum('bchw,oc->bohw', t, w)

    def maxpool2(t):
        b, o, h, w = t.shape
        return t.reshape(b, o, h // 2, 2, w // 2, 2).max(axis=(3, 5))

    theta = conv1x1(x, w_theta).reshape(B, C8, H * W)
    phi = maxpool2(conv1x1(x, w_phi)).reshape(B, C8, H * W // 4)
    g = maxpool2(conv1x1(x, w_g)).reshape(B, C2, H * W // 4)
    beta = jax.nn.softmax(jnp.einsum('bcn,bcm->bnm', theta, phi), axis=-1)
    o_pre = jnp.einsum('bcm,bnm->bcn', g, beta).reshape(B, C2, H, W)
    o = conv1x1(o_pre, w_o)
    return gamma * o + x


if __name__ == "__main__":
    key = jax.random.PRNGKey(0)
    B, ch, H, W = 2, 64, 16, 16            # NCHW like the PyTorch module
    c8, c2 = ch // 8, ch // 2

    ks = jax.random.split(key, 10)
    x = jax.random.normal(ks[0], (B, ch, H, W), jnp.float32)

    # Conv1x1 weights (out, in, 1, 1) + SN "u" buffers (1, out), deterministic.
    w_theta4 = 0.1 * jax.random.normal(ks[1], (c8, ch, 1, 1), jnp.float32)
    w_phi4   = 0.1 * jax.random.normal(ks[2], (c8, ch, 1, 1), jnp.float32)
    w_g4     = 0.1 * jax.random.normal(ks[3], (c2, ch, 1, 1), jnp.float32)
    w_o4     = 0.1 * jax.random.normal(ks[4], (ch, c2, 1, 1), jnp.float32)
    u_theta  = jax.random.normal(ks[5], (1, c8), jnp.float32)
    u_phi    = jax.random.normal(ks[6], (1, c8), jnp.float32)
    u_g      = jax.random.normal(ks[7], (1, c2), jnp.float32)
    u_o      = jax.random.normal(ks[8], (1, ch), jnp.float32)

    # Spectral normalization (SN.W_ with num_svs=1, num_itrs=1) — JAX glue.
    w_theta = spectral_normalize(w_theta4, u_theta)
    w_phi   = spectral_normalize(w_phi4, u_phi)
    w_g     = spectral_normalize(w_g4, u_g)
    w_o     = spectral_normalize(w_o4, u_o)

    # Module initializes gamma = 0.0 (residual-only); use a nonzero value so
    # the attention path is actually exercised.
    gamma = 0.5

    ref = attention_ref(x, w_theta, w_phi, w_g, w_o, gamma)
    max_abs_ref = float(jnp.max(jnp.abs(ref)))

    # 1) f32 path, single query tile (tq = HW) — strict check.
    out_a = attention_pallas(x, w_theta, w_phi, w_g, w_o, gamma,
                             use_bf16=False)
    out_a = jax.block_until_ready(out_a)
    assert out_a.shape == x.shape and out_a.dtype == x.dtype
    err_a = float(jnp.max(jnp.abs(out_a - ref)))
    assert jnp.allclose(out_a, ref, atol=3e-4, rtol=3e-4), \
        f"f32 (single tile) max abs err = {err_a}"

    # 2) f32 path, tiled query axis — strict check.
    out_b = attention_pallas(x, w_theta, w_phi, w_g, w_o, gamma,
                             tq=64, use_bf16=False)
    out_b = jax.block_until_ready(out_b)
    err_b = float(jnp.max(jnp.abs(out_b - ref)))
    assert jnp.allclose(out_b, ref, atol=3e-4, rtol=3e-4), \
        f"f32 (tiled q) max abs err = {err_b}"

    # 3) f32 path, tiled query axis with the q-split (v7x B==1 style) grid.
    out_c = attention_pallas(x, w_theta, w_phi, w_g, w_o, gamma,
                             tq=64, use_bf16=False, q_splits=2)
    out_c = jax.block_until_ready(out_c)
    err_c = float(jnp.max(jnp.abs(out_c - ref)))
    assert jnp.allclose(out_c, ref, atol=3e-4, rtol=3e-4), \
        f"f32 (q-split) max abs err = {err_c}"

    # 4) bf16 matmul path (production default) — relative-error sanity check.
    out_d = attention_pallas(x, w_theta, w_phi, w_g, w_o, gamma,
                             tq=64, use_bf16=True)
    out_d = jax.block_until_ready(out_d)
    err_d = float(jnp.max(jnp.abs(out_d - ref)))
    assert out_d.shape == x.shape
    assert err_d <= 0.08 * max_abs_ref + 0.05, \
        f"bf16 max abs err = {err_d} (max |ref| = {max_abs_ref})"

    print("KERNEL_OK")
</pallas_src>

<mosaic_0001>
module attributes {stable_mosaic.version = 11 : i64} {
  func.func @kernel(%arg0: i32, %arg1: i32, %arg2: i32, %arg3: memref<1x256x128xf32, #tpu.memory_space<vmem>>, %arg4: memref<128x8xf32, #tpu.memory_space<vmem>>, %arg5: memref<8x128xf32, #tpu.memory_space<vmem>>, %arg6: memref<128x32xf32, #tpu.memory_space<vmem>>, %arg7: memref<32x128xf32, #tpu.memory_space<vmem>>, %arg8: memref<1x256x128xf32, #tpu.memory_space<vmem>>, %arg9: memref<8x64xf32, #tpu.memory_space<vmem>>, %arg10: memref<64x32xf32, #tpu.memory_space<vmem>>) attributes {dimension_semantics = [#tpu.dimension_semantics<parallel>, #tpu.dimension_semantics<parallel>, #tpu.dimension_semantics<arbitrary>], iteration_bounds = array<i64: 2, 1, 1>, scalar_prefetch = 0 : i64, scratch_operands = 2 : i64, tpu.core_type = #tpu.core_type<tc>, window_params = [{transform_indices = @transform_0, window_bounds = array<i64: 1, 256, 128>}, {pipeline_mode = #tpu.pipeline_mode<synchronous>, transform_indices = @transform_1, window_bounds = array<i64: 128, 8>}, {pipeline_mode = #tpu.pipeline_mode<synchronous>, transform_indices = @transform_2, window_bounds = array<i64: 8, 128>}, {pipeline_mode = #tpu.pipeline_mode<synchronous>, transform_indices = @transform_3, window_bounds = array<i64: 128, 32>}, {pipeline_mode = #tpu.pipeline_mode<synchronous>, transform_indices = @transform_4, window_bounds = array<i64: 32, 128>}, {transform_indices = @transform_5, window_bounds = array<i64: 1, 256, 128>}]} {
    %c0_i32 = arith.constant 0 : i32
    %0 = arith.cmpi eq, %arg2, %c0_i32 : i32
    %1 = arith.extui %0 : i1 to i32
    %c0_i32_0 = arith.constant 0 : i32
    %2 = arith.cmpi ne, %1, %c0_i32_0 : i32
    scf.if %2 {
      %c0_19 = arith.constant 0 : index
      %c0_20 = arith.constant 0 : index
      %c0_21 = arith.constant 0 : index
      %27 = vector.load %arg3[%c0_19, %c0_20, %c0_21] : memref<1x256x128xf32, #tpu.memory_space<vmem>>, vector<1x64x128xf32>
      %28 = vector.shape_cast %27 : vector<1x64x128xf32> to vector<64x128xf32>
      %c0_22 = arith.constant 0 : index
      %c0_23 = arith.constant 0 : index
      %29 = vector.load %arg5[%c0_22, %c0_23] : memref<8x128xf32, #tpu.memory_space<vmem>>, vector<8x128xf32>
      %cst_24 = arith.constant dense<0.000000e+00> : vector<8x64xf32>
      %30 = tpu.matmul %29, %28, %cst_24 {dimension_numbers = #tpu.dot_dimension_numbers<[1], [1], [0], [0], [0, 0, 1, 0], [], []>} : vector<8x128xf32>, vector<64x128xf32>, vector<8x64xf32> -> vector<8x64xf32>
      %c0_25 = arith.constant 0 : index
      %c0_26 = arith.constant 0 : index
      %31 = vector.load %arg6[%c0_25, %c0_26] : memref<128x32xf32, #tpu.memory_space<vmem>>, vector<128x32xf32>
      %cst_27 = arith.constant dense<0.000000e+00> : vector<64x32xf32>
      %32 = tpu.matmul %28, %31, %cst_27 {dimension_numbers = #tpu.dot_dimension_numbers<[1], [0], [0], [1], [0, 0, 1, 1], [], []>} : vector<64x128xf32>, vector<128x32xf32>, vector<64x32xf32> -> vector<64x32xf32>
      %c0_28 = arith.constant 0 : index
      %c64 = arith.constant 64 : index
      %c0_29 = arith.constant 0 : index
      %33 = vector.load %arg3[%c0_28, %c64, %c0_29] : memref<1x256x128xf32, #tpu.memory_space<vmem>>, vector<1x64x128xf32>
      %34 = vector.shape_cast %33 : vector<1x64x128xf32> to vector<64x128xf32>
      %c0_30 = arith.constant 0 : index
      %c0_31 = arith.constant 0 : index
      %35 = vector.load %arg5[%c0_30, %c0_31] : memref<8x128xf32, #tpu.memory_space<vmem>>, vector<8x128xf32>
      %cst_32 = arith.constant dense<0.000000e+00> : vector<8x64xf32>
      %36 = tpu.matmul %35, %34, %cst_32 {dimension_numbers = #tpu.dot_dimension_numbers<[1], [1], [0], [0], [0, 0, 1, 0], [], []>} : vector<8x128xf32>, vector<64x128xf32>, vector<8x64xf32> -> vector<8x64xf32>
      %c0_33 = arith.constant 0 : index
      %c0_34 = arith.constant 0 : index
      %37 = vector.load %arg6[%c0_33, %c0_34] : memref<128x32xf32, #tpu.memory_space<vmem>>, vector<128x32xf32>
      %cst_35 = arith.constant dense<0.000000e+00> : vector<64x32xf32>
      %38 = tpu.matmul %34, %37, %cst_35 {dimension_numbers = #tpu.dot_dimension_numbers<[1], [0], [0], [1], [0, 0, 1, 1], [], []>} : vector<64x128xf32>, vector<128x32xf32>, vector<64x32xf32> -> vector<64x32xf32>
      %39 = arith.maximumf %30, %36 : vector<8x64xf32>
      %40 = arith.maximumf %32, %38 : vector<64x32xf32>
      %c0_36 = arith.constant 0 : index
      %c128 = arith.constant 128 : index
      %c0_37 = arith.constant 0 : index
      %41 = vector.load %arg3[%c0_36, %c128, %c0_37] : memref<1x256x128xf32, #tpu.memory_space<vmem>>, vector<1x64x128xf32>
      %42 = vector.shape_cast %41 : vector<1x64x128xf32> to vector<64x128xf32>
      %c0_38 = arith.constant 0 : index
      %c0_39 = arith.constant 0 : index
      %43 = vector.load %arg5[%c0_38, %c0_39] : memref<8x128xf32, #tpu.memory_space<vmem>>, vector<8x128xf32>
      %cst_40 = arith.constant dense<0.000000e+00> : vector<8x64xf32>
      %44 = tpu.matmul %43, %42, %cst_40 {dimension_numbers = #tpu.dot_dimension_numbers<[1], [1], [0], [0], [0, 0, 1, 0], [], []>} : vector<8x128xf32>, vector<64x128xf32>, vector<8x64xf32> -> vector<8x64xf32>
      %c0_41 = arith.constant 0 : index
      %c0_42 = arith.constant 0 : index
      %45 = vector.load %arg6[%c0_41, %c0_42] : memref<128x32xf32, #tpu.memory_space<vmem>>, vector<128x32xf32>
      %cst_43 = arith.constant dense<0.000000e+00> : vector<64x32xf32>
      %46 = tpu.matmul %42, %45, %cst_43 {dimension_numbers = #tpu.dot_dimension_numbers<[1], [0], [0], [1], [0, 0, 1, 1], [], []>} : vector<64x128xf32>, vector<128x32xf32>, vector<64x32xf32> -> vector<64x32xf32>
      %47 = arith.maximumf %39, %44 : vector<8x64xf32>
      %48 = arith.maximumf %40, %46 : vector<64x32xf32>
      %c0_44 = arith.constant 0 : index
      %c192 = arith.constant 192 : index
      %c0_45 = arith.constant 0 : index
      %49 = vector.load %arg3[%c0_44, %c192, %c0_45] : memref<1x256x128xf32, #tpu.memory_space<vmem>>, vector<1x64x128xf32>
      %50 = vector.shape_cast %49 : vector<1x64x128xf32> to vector<64x128xf32>
      %c0_46 = arith.constant 0 : index
      %c0_47 = arith.constant 0 : index
      %51 = vector.load %arg5[%c0_46, %c0_47] : memref<8x128xf32, #tpu.memory_space<vmem>>, vector<8x128xf32>
      %cst_48 = arith.constant dense<0.000000e+00> : vector<8x64xf32>
      %52 = tpu.matmul %51, %50, %cst_48 {dimension_numbers = #tpu.dot_dimension_numbers<[1], [1], [0], [0], [0, 0, 1, 0], [], []>} : vector<8x128xf32>, vector<64x128xf32>, vector<8x64xf32> -> vector<8x64xf32>
      %c0_49 = arith.constant 0 : index
      %c0_50 = arith.constant 0 : index
      %53 = vector.load %arg6[%c0_49, %c0_50] : memref<128x32xf32, #tpu.memory_space<vmem>>, vector<128x32xf32>
      %cst_51 = arith.constant dense<0.000000e+00> : vector<64x32xf32>
      %54 = tpu.matmul %50, %53, %cst_51 {dimension_numbers = #tpu.dot_dimension_numbers<[1], [0], [0], [1], [0, 0, 1, 1], [], []>} : vector<64x128xf32>, vector<128x32xf32>, vector<64x32xf32> -> vector<64x32xf32>
      %55 = arith.maximumf %47, %52 : vector<8x64xf32>
      %56 = arith.maximumf %48, %54 : vector<64x32xf32>
      %c0_52 = arith.constant 0 : index
      %c0_53 = arith.constant 0 : index
      %57 = vector.load %arg9[%c0_52, %c0_53] : memref<8x64xf32, #tpu.memory_space<vmem>>, vector<8x64xf32>
      tpu.vector_store %arg9[%c0_52, %c0_53], %55 {strides = array<i32>} : memref<8x64xf32, #tpu.memory_space<vmem>>, vector<8x64xf32>,
      %c0_54 = arith.constant 0 : index
      %c0_55 = arith.constant 0 : index
      %58 = vector.load %arg10[%c0_54, %c0_55] : memref<64x32xf32, #tpu.memory_space<vmem>>, vector<64x32xf32>
      tpu.vector_store %arg10[%c0_54, %c0_55], %56 {strides = array<i32>} : memref<64x32xf32, #tpu.memory_space<vmem>>, vector<64x32xf32>,
    } else {
    }
    %c0 = arith.constant 0 : index
    %c0_1 = arith.constant 0 : index
    %c0_2 = arith.constant 0 : index
    %3 = vector.load %arg3[%c0, %c0_1, %c0_2] : memref<1x256x128xf32, #tpu.memory_space<vmem>>, vector<1x256x128xf32>
    %4 = vector.shape_cast %3 : vector<1x256x128xf32> to vector<256x128xf32>
    %c0_3 = arith.constant 0 : index
    %c0_4 = arith.constant 0 : index
    %5 = vector.load %arg4[%c0_3, %c0_4] : memref<128x8xf32, #tpu.memory_space<vmem>>, vector<128x8xf32>
    %cst = arith.constant dense<0.000000e+00> : vector<256x8xf32>
    %6 = tpu.matmul %4, %5, %cst {dimension_numbers = #tpu.dot_dimension_numbers<[1], [0], [0], [1], [0, 0, 1, 1], [], []>} : vector<256x128xf32>, vector<128x8xf32>, vector<256x8xf32> -> vector<256x8xf32>
    %c0_5 = arith.constant 0 : index
    %c0_6 = arith.constant 0 : index
    %7 = vector.load %arg9[%c0_5, %c0_6] : memref<8x64xf32, #tpu.memory_space<vmem>>, vector<8x64xf32>
    %cst_7 = arith.constant dense<0.000000e+00> : vector<256x64xf32>
    %8 = tpu.matmul %6, %7, %cst_7 {dimension_numbers = #tpu.dot_dimension_numbers<[1], [0], [0], [1], [0, 0, 1, 1], [], []>} : vector<256x8xf32>, vector<8x64xf32>, vector<256x64xf32> -> vector<256x64xf32>
    %cst_8 = arith.constant dense<0xFF800000> : vector<256xf32>
    %9 = vector.multi_reduction <maximumf>, %8, %cst_8 [1] : vector<256x64xf32> to vector<256xf32>
    %10 = vector.shape_cast %9 : vector<256xf32> to vector<256x1xf32>
    %11 = vector.broadcast %10 : vector<256x1xf32> to vector<256x64xf32>
    %12 = arith.subf %8, %11 : vector<256x64xf32>
    %13 = math.exp %12 : vector<256x64xf32>
    %cst_9 = arith.constant dense<0.000000e+00> : vector<256xf32>
    %14 = vector.multi_reduction <add>, %13, %cst_9 [1] : vector<256x64xf32> to vector<256xf32>
    %15 = vector.shape_cast %14 : vector<256xf32> to vector<256x1xf32>
    %c0_10 = arith.constant 0 : index
    %c0_11 = arith.constant 0 : index
    %16 = vector.load %arg10[%c0_10, %c0_11] : memref<64x32xf32, #tpu.memory_space<vmem>>, vector<64x32xf32>
    %cst_12 = arith.constant dense<0.000000e+00> : vector<256x32xf32>
    %17 = tpu.matmul %13, %16, %cst_12 {dimension_numbers = #tpu.dot_dimension_numbers<[1], [0], [0], [1], [0, 0, 1, 1], [], []>} : vector<256x64xf32>, vector<64x32xf32>, vector<256x32xf32> -> vector<256x32xf32>
    %18 = tpu.reciprocal %15 : vector<256x1xf32> -> vector<256x1xf32>
    %19 = vector.broadcast %18 : vector<256x1xf32> to vector<256x32xf32>
    %20 = arith.mulf %17, %19 : vector<256x32xf32>
    %c0_13 = arith.constant 0 : index
    %c0_14 = arith.constant 0 : index
    %21 = vector.load %arg7[%c0_13, %c0_14] : memref<32x128xf32, #tpu.memory_space<vmem>>, vector<32x128xf32>
    %cst_15 = arith.constant dense<0.000000e+00> : vector<256x128xf32>
    %22 = tpu.matmul %20, %21, %cst_15 {dimension_numbers = #tpu.dot_dimension_numbers<[1], [0], [0], [1], [0, 0, 1, 1], [], []>} : vector<256x32xf32>, vector<32x128xf32>, vector<256x128xf32> -> vector<256x128xf32>
    %23 = arith.addf %22, %4 : vector<256x128xf32>
    %c0_16 = arith.constant 0 : index
    %c0_17 = arith.constant 0 : index
    %c0_18 = arith.constant 0 : index
    %24 = vector.load %arg8[%c0_16, %c0_17, %c0_18] : memref<1x256x128xf32, #tpu.memory_space<vmem>>, vector<1x256x128xf32>
    %25 = vector.shape_cast %24 : vector<1x256x128xf32> to vector<256x128xf32>
    %26 = vector.shape_cast %23 : vector<256x128xf32> to vector<1x256x128xf32>
    tpu.vector_store %arg8[%c0_16, %c0_17, %c0_18], %26 {strides = array<i32>} : memref<1x256x128xf32, #tpu.memory_space<vmem>>, vector<1x256x128xf32>,
    return
  }
  func.func @transform_0(%arg0: i32, %arg1: i32, %arg2: i32) -> (i32, i32, i32) {
    %c0_i32 = arith.constant 0 : i32
    %c0_i32_0 = arith.constant 0 : i32
    %c0_i32_1 = arith.constant 0 : i32
    return %arg0, %c0_i32, %c0_i32_0 : i32, i32, i32
  }
  func.func @transform_1(%arg0: i32, %arg1: i32, %arg2: i32) -> (i32, i32) {
    %c0_i32 = arith.constant 0 : i32
    %c0_i32_0 = arith.constant 0 : i32
    %c0_i32_1 = arith.constant 0 : i32
    return %c0_i32, %c0_i32_0 : i32, i32
  }
  func.func @transform_2(%arg0: i32, %arg1: i32, %arg2: i32) -> (i32, i32) {
    %c0_i32 = arith.constant 0 : i32
    %c0_i32_0 = arith.constant 0 : i32
    %c0_i32_1 = arith.constant 0 : i32
    return %c0_i32, %c0_i32_0 : i32, i32
  }
  func.func @transform_3(%arg0: i32, %arg1: i32, %arg2: i32) -> (i32, i32) {
    %c0_i32 = arith.constant 0 : i32
    %c0_i32_0 = arith.constant 0 : i32
    %c0_i32_1 = arith.constant 0 : i32
    return %c0_i32, %c0_i32_0 : i32, i32
  }
  func.func @transform_4(%arg0: i32, %arg1: i32, %arg2: i32) -> (i32, i32) {
    %c0_i32 = arith.constant 0 : i32
    %c0_i32_0 = arith.constant 0 : i32
    %c0_i32_1 = arith.constant 0 : i32
    return %c0_i32, %c0_i32_0 : i32, i32
  }
  func.func @transform_5(%arg0: i32, %arg1: i32, %arg2: i32) -> (i32, i32, i32) {
    %c1_i32 = arith.constant 1 : i32
    %0 = arith.muli %arg1, %c1_i32 : i32
    %1 = arith.addi %0, %arg2 : i32
    %c0_i32 = arith.constant 0 : i32
    %c0_i32_0 = arith.constant 0 : i32
    return %arg0, %1, %c0_i32 : i32, i32, i32
  }
}

</mosaic_0001>

<llo_original>
// kernel: tpu_custom_call.1
$region0: #{tpu_custom_call.1}
  #allocation0 [shape = 'u32[]', space=smem, size = 0x4, offset = 0x4, fixed_abs, tag = 'smem constant byte address 0x4 - core index']
  #allocation1 [shape = 'u32[144,128]{1,0:T(1,128)}', space=vmem, size = 0x12000, scoped, tag = 'internal scratch']
  #allocation2 [shape = 'f32[8,64]{1,0:T(8,128)}', space=vmem, size = 0x1000, scoped, tag = 'scratch operand']
  #allocation3 [shape = 'f32[64,32]{1,0:T(8,128)}', space=vmem, size = 0x8000, scoped, tag = 'scratch operand']
  %s0 = inlined_call_operand.hbm [shape: f32[2,256,128], index: 0, kind: input, shape index: {}]
  %s1 = inlined_call_operand.vmem [shape: f32[128,8], index: 1, kind: input, shape index: {}]
  %s2 = inlined_call_operand.vmem [shape: f32[8,128], index: 2, kind: input, shape index: {}]
  %s3 = inlined_call_operand.vmem [shape: f32[128,32], index: 3, kind: input, shape index: {}]
  %s4 = inlined_call_operand.vmem [shape: f32[32,128], index: 4, kind: input, shape index: {}]
  %s5 = inlined_call_operand.hbm [shape: f32[2,256,128], index: 5, kind: output, shape index: {}]
  %s6 = sld [smem:[#allocation0]]
  $region61: #{tpu_custom_call.1} parent=0
    _
  %s8 = ssub.s32 1, %s6
  %s9 = scalar_select 0, %s8, %s6
  $region1: #{tpu_custom_call.1} parent=0
    #allocation4 [shape = 'u8[262144]{0}', space=vmem, size = 0x40000, scoped, tag = 'input window, operand 0']
    #allocation5 [shape = 's32[2]{0}', space=sflag, size = 0x8, scoped, tag = 'scoped memory for tpu_custom_call.1']
    #allocation6 [shape = 's32[2]{0}', space=sflag, size = 0x8, scoped, tag = 'scoped memory for tpu_custom_call.1']
    #allocation7 [shape = 'u8[262144]{0}', space=vmem, size = 0x40000, scoped, tag = 'output window, operand 0']
    %10 = vsyncpa [#allocation5], 0
    %s11 = scalar_lea.sflag [#allocation5], 1
    %12 = vsyncpa %s11, 0
    %13 = vsyncpa [#allocation6], 0
    %s14 = scalar_lea.sflag [#allocation6], 1
    %15 = vsyncpa %s14, 0
    loop: start=0, step=1, limit=4
    $region2: #{tpu_custom_call.1} parent=1 // loop_pre_header
      _
    $region3: #{tpu_custom_call.1} parent=1 // loop_header
      %s17 = sphi 0, %s21
      %p18 = scmp.ge.s32.totalorder %s17, 4
      %s24 = sphi 0, %s43
      %s25 = sphi 0, %s39
      %s26 = sphi 0, %s35
      %s27 = sphi 0, %s24
      %s28 = sphi 0, %s25
      %s29 = sphi 0, %s26
      %s30 = sphi 0, %s27
      %s31 = sphi 0, %s28
      %s32 = sphi 0, %s29
      %s46 = sphi 0, %s48
      %s49 = sphi 0, %s46
      %s50 = sphi 0, %s49
      %s66 = sphi 0, %s50
      %s70 = sphi 0, %s70
      %s72 = sphi 0, %s70
      %s73 = sphi 0, %s72
      %s87 = sphi 0, %s73
      %s91 = sphi 0, %s91
      %s93 = sphi 0, %s91
      %s94 = sphi 0, %s93
      %s108 = sphi 0, %s94
      %s112 = sphi 0, %s112
      %s114 = sphi 0, %s112
      %s115 = sphi 0, %s114
      %s129 = sphi 0, %s115
      %s133 = sphi 0, %s133
      %s135 = sphi 0, %s133
      %s136 = sphi 0, %s135
      %s150 = sphi 0, %s136
      %s160 = sphi 0, %s162
      %s163 = sphi 0, %s160
      %s164 = sphi 0, %s163
      %s180 = sphi 0, %s164
    $region4: #{tpu_custom_call.1} parent=1 // loop_header_branch
      %20 = sbr.rel (%p18) target = $region8
    $region5: #{tpu_custom_call.1} parent=1 // loop_body
      %s22 = ssub.s32 %s17, 1
      %s23 = ssub.s32 %s17, 2
      %s33 = sadd.s32 1, %s26
      %p34 = scmp.ge.s32.totalorder %s33, 1
      %s35 = scalar_select %p34, 0, %s33
      %s36 = sadd.s32 1, %s25
      %s37 = scalar_select %p34, %s36, %s25
      %p38 = scmp.ge.s32.totalorder %s37, 1
      %s39 = scalar_select %p38, 0, %s37
      %s40 = sadd.s32 1, %s24
      %s41 = scalar_select %p38, %s40, %s24
      %p42 = scmp.ge.s32.totalorder %s41, 2
      %s43 = scalar_select %p42, 0, %s41
      %s44 = ssub.s32 %s24, %s43
      %p45 = scmp.eq.s32.totalorder %s44, 0
      %s47 = sadd.s32 %s46, 1
      %s48 = scalar_select %p45, %s46, %s47
      %p51 = pneg %p45
      %p52 = scmp.eq.s32.totalorder %s17, 1
      %p53 = por %p51, %p52
      %p54 = scmp.ne.s32.totalorder %s46, %s49
      %p55 = scmp.eq.s32.totalorder %s17, 0
      %p56 = por %p54, %p55
      %p57 = scmp.ne.s32.totalorder %s46, %s49
      %p58 = scmp.eq.s32.totalorder %s22, 1
      %p59 = por %p57, %p58
      %p60 = scmp.ne.s32.totalorder %s49, %s50
      %p61 = scmp.eq.s32.totalorder %s22, 0
      %p62 = por %p60, %p61
      %p63 = scmp.ne.s32.totalorder %s49, %s50
      %p64 = scmp.eq.s32.totalorder %s23, 1
      %p65 = por %p63, %p64
      %p67 = scmp.ne.s32.totalorder %s50, %s66
      %p68 = scmp.eq.s32.totalorder %s23, 0
      %p69 = por %p67, %p68
      %s71 = sadd.s32 %s70, 1
      %p74 = scmp.eq.s32.totalorder %s17, 1
      %p75 = scmp.ne.s32.totalorder %s70, %s72
      %p76 = scmp.eq.s32.totalorder %s17, 0
      %p77 = por %p75, %p76
      %p78 = scmp.ne.s32.totalorder %s70, %s72
      %p79 = scmp.eq.s32.totalorder %s22, 1
      %p80 = por %p78, %p79
      %p81 = scmp.ne.s32.totalorder %s72, %s73
      %p82 = scmp.eq.s32.totalorder %s22, 0
      %p83 = por %p81, %p82
      %p84 = scmp.ne.s32.totalorder %s72, %s73
      %p85 = scmp.eq.s32.totalorder %s23, 1
      %p86 = por %p84, %p85
      %p88 = scmp.ne.s32.totalorder %s73, %s87
      %p89 = scmp.eq.s32.totalorder %s23, 0
      %p90 = por %p88, %p89
      %s92 = sadd.s32 %s91, 1
      %p95 = scmp.eq.s32.totalorder %s17, 1
      %p96 = scmp.ne.s32.totalorder %s91, %s93
      %p97 = scmp.eq.s32.totalorder %s17, 0
      %p98 = por %p96, %p97
      %p99 = scmp.ne.s32.totalorder %s91, %s93
      %p100 = scmp.eq.s32.totalorder %s22, 1
      %p101 = por %p99, %p100
      %p102 = scmp.ne.s32.totalorder %s93, %s94
      %p103 = scmp.eq.s32.totalorder %s22, 0
      %p104 = por %p102, %p103
      %p105 = scmp.ne.s32.totalorder %s93, %s94
      %p106 = scmp.eq.s32.totalorder %s23, 1
      %p107 = por %p105, %p106
      %p109 = scmp.ne.s32.totalorder %s94, %s108
      %p110 = scmp.eq.s32.totalorder %s23, 0
      %p111 = por %p109, %p110
      %s113 = sadd.s32 %s112, 1
      %p116 = scmp.eq.s32.totalorder %s17, 1
      %p117 = scmp.ne.s32.totalorder %s112, %s114
      %p118 = scmp.eq.s32.totalorder %s17, 0
      %p119 = por %p117, %p118
      %p120 = scmp.ne.s32.totalorder %s112, %s114
      %p121 = scmp.eq.s32.totalorder %s22, 1
      %p122 = por %p120, %p121
      %p123 = scmp.ne.s32.totalorder %s114, %s115
      %p124 = scmp.eq.s32.totalorder %s22, 0
      %p125 = por %p123, %p124
      %p126 = scmp.ne.s32.totalorder %s114, %s115
      %p127 = scmp.eq.s32.totalorder %s23, 1
      %p128 = por %p126, %p127
      %p130 = scmp.ne.s32.totalorder %s115, %s129
      %p131 = scmp.eq.s32.totalorder %s23, 0
      %p132 = por %p130, %p131
      %s134 = sadd.s32 %s133, 1
      %p137 = scmp.eq.s32.totalorder %s17, 1
      %p138 = scmp.ne.s32.totalorder %s133, %s135
      %p139 = scmp.eq.s32.totalorder %s17, 0
      %p140 = por %p138, %p139
      %p141 = scmp.ne.s32.totalorder %s133, %s135
      %p142 = scmp.eq.s32.totalorder %s22, 1
      %p143 = por %p141, %p142
      %p144 = scmp.ne.s32.totalorder %s135, %s136
      %p145 = scmp.eq.s32.totalorder %s22, 0
      %p146 = por %p144, %p145
      %p147 = scmp.ne.s32.totalorder %s135, %s136
      %p148 = scmp.eq.s32.totalorder %s23, 1
      %p149 = por %p147, %p148
      %p151 = scmp.ne.s32.totalorder %s136, %s150
      %p152 = scmp.eq.s32.totalorder %s23, 0
      %p153 = por %p151, %p152
      %s154 = sadd.s32 %s25, %s26
      %s155 = sadd.s32 %s39, %s35
      %s156 = ssub.s32 %s24, %s43
      %s157 = ssub.s32 %s154, %s155
      %s158 = sor.u32 %s156, %s157
      %p159 = scmp.eq.s32.totalorder %s158, 0
      %s161 = sadd.s32 %s160, 1
      %s162 = scalar_select %p159, %s160, %s161
      %p165 = pneg %p159
      %p166 = scmp.eq.s32.totalorder %s17, 1
      %p167 = por %p165, %p166
      %p168 = scmp.ne.s32.totalorder %s160, %s163
      %p169 = scmp.eq.s32.totalorder %s17, 0
      %p170 = por %p168, %p169
      %p171 = scmp.ne.s32.totalorder %s160, %s163
      %p172 = scmp.eq.s32.totalorder %s22, 1
      %p173 = por %p171, %p172
      %p174 = scmp.ne.s32.totalorder %s163, %s164
      %p175 = scmp.eq.s32.totalorder %s22, 0
      %p176 = por %p174, %p175
      %p177 = scmp.ne.s32.totalorder %s163, %s164
      %p178 = scmp.eq.s32.totalorder %s23, 1
      %p179 = por %p177, %p178
      %p181 = scmp.ne.s32.totalorder %s164, %s180
      %p182 = scmp.eq.s32.totalorder %s23, 0
      %p183 = por %p181, %p182
      %p184 = scmp.le.s32.totalorder 1, %s17
      %p185 = scmp.lt.s32.totalorder %s17, 3
      %p186 = pnand %p184, %p185
      %p187 = pneg %p186
      // Predicated region
      $region9: #{tpu_custom_call.1} parent=5 // pred_check
        _
      $region10: #{tpu_custom_call.1} parent=5 // pred_check_branch
        %189 = sbr.rel (%p186) target = $region12
      $region11: #{tpu_custom_call.1} parent=5 // pred_region
        %s190 = ssub.s32 %s17, 1
        // Predicated region
        $region13: #{tpu_custom_call.1} parent=11 // pred_check
          %p191 = pneg %p83
        $region14: #{tpu_custom_call.1} parent=11 // pred_check_branch
          %193 = sbr.rel (%p191) target = $region16
        $region15: #{tpu_custom_call.1} parent=11 // pred_region
          _
        $region16: #{tpu_custom_call.1} parent=11 // pred_fallthru
          _
        // Predicated region
        $region17: #{tpu_custom_call.1} parent=11 // pred_check
          %p194 = pneg %p104
        $region18: #{tpu_custom_call.1} parent=11 // pred_check_branch
          %196 = sbr.rel (%p194) target = $region20
        $region19: #{tpu_custom_call.1} parent=11 // pred_region
          _
        $region20: #{tpu_custom_call.1} parent=11 // pred_fallthru
          _
        // Predicated region
        $region21: #{tpu_custom_call.1} parent=11 // pred_check
          %p197 = pneg %p125
        $region22: #{tpu_custom_call.1} parent=11 // pred_check_branch
          %199 = sbr.rel (%p197) target = $region24
        $region23: #{tpu_custom_call.1} parent=11 // pred_region
          _
        $region24: #{tpu_custom_call.1} parent=11 // pred_fallthru
          _
        // Predicated region
        $region25: #{tpu_custom_call.1} parent=11 // pred_check
          %p200 = pneg %p146
        $region26: #{tpu_custom_call.1} parent=11 // pred_check_branch
          %202 = sbr.rel (%p200) target = $region28
        $region27: #{tpu_custom_call.1} parent=11 // pred_region
          _
        $region28: #{tpu_custom_call.1} parent=11 // pred_fallthru
          _
      $region12: #{tpu_custom_call.1} parent=5 // pred_fallthru
        _
      %p203 = scmp.lt.s32.totalorder %s17, 2
      // Predicated region
      $region29: #{tpu_custom_call.1} parent=5 // pred_check
        %p204 = pneg %p203
      $region30: #{tpu_custom_call.1} parent=5 // pred_check_branch
        %206 = sbr.rel (%p204) target = $region32
      $region31: #{tpu_custom_call.1} parent=5 // pred_region
        // Predicated region
        $region33: #{tpu_custom_call.1} parent=31 // pred_check
          %p207 = pneg %p56
        $region34: #{tpu_custom_call.1} parent=31 // pred_check_branch
          %209 = sbr.rel (%p207) target = $region36
        $region35: #{tpu_custom_call.1} parent=31 // pred_region
          %s210 = sand.u32 %s46, 1
          %s211 = scalar_lea.sflag [#allocation5], %s210
          %s212 = sand.u32 %s46, 1
          %s213 = smul.addr %s212, 256
          %s214 = scalar_lea.vmem [#allocation4], %s213
          %s216 = ssub.s32 4096, 4096
          %217 = vsyncadd %s211, %s216
          %s218 = smul.addr %s24, 32
          %s219 = smul.addr %s218, 128
          %s220 = scalar_lea.hbm %s0, %s219
          %s221 = sshll.u32 %s214, 4
          %s222 = int_to_ptr.vmem [resolvable:$true] %s221
          %227 = dma.hbm_to_vmem [thread:$0]  %s220, 4096, %s222, %s211, 128, 128, 8
        $region36: #{tpu_custom_call.1} parent=31 // pred_fallthru
          _
      $region32: #{tpu_custom_call.1} parent=5 // pred_fallthru
        _
      %p228 = scmp.le.s32.totalorder 1, %s17
      %p229 = scmp.lt.s32.totalorder %s17, 3
      %p230 = pnand %p228, %p229
      %p231 = pneg %p230
      // Predicated region
      $region37: #{tpu_custom_call.1} parent=5 // pred_check
        _
      $region38: #{tpu_custom_call.1} parent=5 // pred_check_branch
        %233 = sbr.rel (%p230) target = $region40
      $region39: #{tpu_custom_call.1} parent=5 // pred_region
        %s234 = ssub.s32 %s17, 1
        %s235 = sand.u32 %s49, 1
        %s236 = scalar_lea.sflag [#allocation5], %s235
        %s237 = sand.u32 %s49, 1
        %s238 = smul.addr %s237, 256
        %s239 = scalar_lea.vmem [#allocation4], %s238
        // Predicated region
        $region41: #{tpu_custom_call.1} parent=39 // pred_check
          %p240 = pneg %p62
        $region42: #{tpu_custom_call.1} parent=39 // pred_check_branch
          %242 = sbr.rel (%p240) target = $region44
        $region43: #{tpu_custom_call.1} parent=39 // pred_region
          %243 = dma.done %s236, 4096
        $region44: #{tpu_custom_call.1} parent=39 // pred_fallthru
          _
        %s244 = sand.u32 %s49, 1
        %s245 = scalar_lea.sflag [#allocation5], %s244
        %s246 = sand.u32 %s49, 1
        %s247 = smul.addr %s246, 256
        %s248 = scalar_lea.vmem [#allocation4], %s247
        %p249 = pneg %p62
        %p250 = pneg %p59
        %p251 = pneg %p83
        %p252 = pneg %p80
        %p253 = pneg %p104
        %p254 = pneg %p101
        %p255 = pneg %p125
        %p256 = pneg %p122
        %p257 = pneg %p146
        %p258 = pneg %p143
        %p259 = pneg %p176
        %p260 = pneg %p173
        %s261 = sand.u32 %s163, 1
        %s262 = scalar_lea.sflag [#allocation6], %s261
        %s263 = sand.u32 %s163, 1
        %s264 = smul.addr %s263, 256
        %s265 = scalar_lea.vmem [#allocation7], %s264
        %s266 = sadd.s32 %s28, %s29
        %s267 = smul.u32 32, %s266
        %p268 = scmp.eq.s32.totalorder %s29, 0
        // Predicated region
        $region45: #{tpu_custom_call.1} parent=39 // pred_check
          %p269 = pneg %p268
        $region46: #{tpu_custom_call.1} parent=39 // pred_check_branch
          %271 = sbr.rel (%p269) target = $region48
        $region47: #{tpu_custom_call.1} parent=39 // pred_region
          %v272 = vld [vmem:[%s239] sm:$0xff]
          %v273 = vld [vmem:[%s239 + $0x8] sm:$0xff]
          %v274 = vld [vmem:[%s239 + $0x10] sm:$0xff]
          %v275 = vld [vmem:[%s239 + $0x18] sm:$0xff]
          %v276 = vld [vmem:[%s239 + $0x20] sm:$0xff]
          %v277 = vld [vmem:[%s239 + $0x28] sm:$0xff]
          %v278 = vld [vmem:[%s239 + $0x30] sm:$0xff]
          %v279 = vld [vmem:[%s239 + $0x38] sm:$0xff]
          %v280 = vld [vmem:[%s2] sm:$0xff]
          %281 = vmatprep.subr.mxu0 0.0
          %282 = vmatpush1.xpose.msra.mxu0 %v272
          %283 = vmatprep.subr.mxu0 0.0
          %284 = vmatpush1.xpose.msra.mxu0 %v273
          %285 = vmatprep.subr.mxu0 0.0
          %286 = vmatpush1.xpose.msra.mxu0 %v274
          %287 = vmatprep.subr.mxu0 0.0
          %288 = vmatpush1.xpose.msra.mxu0 %v275
          %289 = vmatprep.subr.mxu0 0.0
          %290 = vmatpush1.xpose.msra.mxu0 %v276
          %291 = vmatprep.subr.mxu0 0.0
          %292 = vmatpush1.xpose.msra.mxu0 %v277
          %293 = vmatprep.subr.mxu0 0.0
          %294 = vmatpush1.xpose.msra.mxu0 %v278
          %295 = vmatprep.subr.mxu0 0.0
          %296 = vmatpush1.xpose.msra.mxu0 %v279
          %297 = vmatprep.subr.mxu0 0.0
          %298 = vmatpush1.xpose.msra.mxu0 0.0
          %299 = vmatprep.subr.mxu0 0.0
          %300 = vmatpush1.xpose.msra.mxu0 0.0
          %301 = vmatprep.subr.mxu0 0.0
          %302 = vmatpush1.xpose.msra.mxu0 0.0
          %303 = vmatprep.subr.mxu0 0.0
          %304 = vmatpush1.xpose.msra.mxu0 0.0
          %305 = vmatprep.subr.mxu0 0.0
          %306 = vmatpush1.xpose.msra.mxu0 0.0
          %307 = vmatprep.subr.mxu0 0.0
          %308 = vmatpush1.xpose.msra.mxu0 0.0
          %309 = vmatprep.subr.mxu0 0.0
          %310 = vmatpush1.xpose.msra.mxu0 0.0
          %311 = vmatprep.subr.mxu0 0.0
          %312 = vmatpush1.xpose.msra.mxu0 0.0
          %313 = vmatprep.subr.mxu0 0.0
          %314 = vmatpush1.xpose.msra.mxu0 0.0
          %315 = vmatprep.subr.mxu0 0.0
          %316 = vmatpush1.xpose.msra.mxu0 0.0
          %317 = vmatprep.subr.mxu0 0.0
          %318 = vmatpush1.xpose.msra.mxu0 0.0
          %319 = vmatprep.subr.mxu0 0.0
          %320 = vmatpush1.xpose.msra.mxu0 0.0
          %321 = vmatprep.subr.mxu0 0.0
          %322 = vmatpush1.xpose.msra.mxu0 0.0
          %323 = vmatprep.subr.mxu0 0.0
          %324 = vmatpush1.xpose.msra.mxu0 0.0
          %325 = vmatprep.subr.mxu0 0.0
          %326 = vmatpush1.xpose.msra.mxu0 0.0
          %327 = vmatprep.subr.mxu0 0.0
          %328 = vmatpush1.xpose.msra.mxu0 0.0
          %329 = vmatprep.subr.mxu0 0.0
          %330 = vmatpush1.xpose.msra.mxu0 0.0
          %331 = vmatprep.subr.mxu0 0.0
          %332 = vmatpush1.xpose.msra.mxu0 0.0
          %333 = vmatprep.subr.mxu0 0.0
          %334 = vmatpush1.xpose.msra.mxu0 0.0
          %335 = vmatprep.subr.mxu0 0.0
          %336 = vmatpush1.xpose.msra.mxu0 0.0
          %337 = vmatprep.subr.mxu0 0.0
          %338 = vmatpush1.xpose.msra.mxu0 0.0
          %339 = vmatprep.subr.mxu0 0.0
          %340 = vmatpush1.xpose.msra.mxu0 0.0
          %341 = vmatprep.subr.mxu0 0.0
          %342 = vmatpush1.xpose.msra.mxu0 0.0
          %343 = vmatprep.subr.mxu0 0.0
          %344 = vmatpush1.xpose.msra.mxu0 0.0
          %345 = vmatprep.mubr.f32.mxu0 0.0
          %346 = vmatmul.mubr.f32.gmra.mrb[0].mxu0 %v280
          %v347 = vpop.f32.mrb[0].mxu0
          %v348 = vadd.f32 0.0, %v347
          %v349 = vpop.f32.mrb[0].mxu0
          %350 = vdwg.mxu0
          %v351 = vld [vmem:[%s3] sm:$0xff]
          %v352 = vld [vmem:[%s3 + $0x8] sm:$0xff]
          %v353 = vld [vmem:[%s3 + $0x10] sm:$0xff]
          %v354 = vld [vmem:[%s3 + $0x18] sm:$0xff]
          %v355 = vld [vmem:[%s3 + $0x20] sm:$0xff]
          %v356 = vld [vmem:[%s3 + $0x28] sm:$0xff]
          %v357 = vld [vmem:[%s3 + $0x30] sm:$0xff]
          %v358 = vld [vmem:[%s3 + $0x38] sm:$0xff]
          %v359 = vld [vmem:[%s3 + $0x40] sm:$0xff]
          %v360 = vld [vmem:[%s3 + $0x48] sm:$0xff]
          %v361 = vld [vmem:[%s3 + $0x50] sm:$0xff]
          %v362 = vld [vmem:[%s3 + $0x58] sm:$0xff]
          %v363 = vld [vmem:[%s3 + $0x60] sm:$0xff]
          %v364 = vld [vmem:[%s3 + $0x68] sm:$0xff]
          %v365 = vld [vmem:[%s3 + $0x70] sm:$0xff]
          %v366 = vld [vmem:[%s3 + $0x78] sm:$0xff]
          %367 = vmatprep.subr.mxu0 0.0
          %368 = vmatpush1.msra.mxu0 %v351
          %369 = vmatprep.subr.mxu0 0.0
          %370 = vmatpush1.msra.mxu0 %v352
          %371 = vmatprep.subr.mxu0 0.0
          %372 = vmatpush1.msra.mxu0 %v353
          %373 = vmatprep.subr.mxu0 0.0
          %374 = vmatpush1.msra.mxu0 %v354
          %375 = vmatprep.subr.mxu0 0.0
          %376 = vmatpush1.msra.mxu0 %v355
          %377 = vmatprep.subr.mxu0 0.0
          %378 = vmatpush1.msra.mxu0 %v356
          %379 = vmatprep.subr.mxu0 0.0
          %380 = vmatpush1.msra.mxu0 %v357
          %381 = vmatprep.subr.mxu0 0.0
          %382 = vmatpush1.msra.mxu0 %v358
          %383 = vmatprep.subr.mxu0 0.0
          %384 = vmatpush1.msra.mxu0 %v359
          %385 = vmatprep.subr.mxu0 0.0
          %386 = vmatpush1.msra.mxu0 %v360
          %387 = vmatprep.subr.mxu0 0.0
          %388 = vmatpush1.msra.mxu0 %v361
          %389 = vmatprep.subr.mxu0 0.0
          %390 = vmatpush1.msra.mxu0 %v362
          %391 = vmatprep.subr.mxu0 0.0
          %392 = vmatpush1.msra.mxu0 %v363
          %393 = vmatprep.subr.mxu0 0.0
          %394 = vmatpush1.msra.mxu0 %v364
          %395 = vmatprep.subr.mxu0 0.0
          %396 = vmatpush1.msra.mxu0 %v365
          %397 = vmatprep.subr.mxu0 0.0
          %398 = vmatpush1.msra.mxu0 %v366
          %399 = vmatprep.subr.mxu0 0.0
          %400 = vmatpush1.msra.mxu0 0.0
          %401 = vmatprep.subr.mxu0 0.0
          %402 = vmatpush1.msra.mxu0 0.0
          %403 = vmatprep.subr.mxu0 0.0
          %404 = vmatpush1.msra.mxu0 0.0
          %405 = vmatprep.subr.mxu0 0.0
          %406 = vmatpush1.msra.mxu0 0.0
          %407 = vmatprep.subr.mxu0 0.0
          %408 = vmatpush1.msra.mxu0 0.0
          %409 = vmatprep.subr.mxu0 0.0
          %410 = vmatpush1.msra.mxu0 0.0
          %411 = vmatprep.subr.mxu0 0.0
          %412 = vmatpush1.msra.mxu0 0.0
          %413 = vmatprep.subr.mxu0 0.0
          %414 = vmatpush1.msra.mxu0 0.0
          %415 = vmatprep.subr.mxu0 0.0
          %416 = vmatpush1.msra.mxu0 0.0
          %417 = vmatprep.subr.mxu0 0.0
          %418 = vmatpush1.msra.mxu0 0.0
          %419 = vmatprep.subr.mxu0 0.0
          %420 = vmatpush1.msra.mxu0 0.0
          %421 = vmatprep.subr.mxu0 0.0
          %422 = vmatpush1.msra.mxu0 0.0
          %423 = vmatprep.subr.mxu0 0.0
          %424 = vmatpush1.msra.mxu0 0.0
          %425 = vmatprep.subr.mxu0 0.0
          %426 = vmatpush1.msra.mxu0 0.0
          %427 = vmatprep.subr.mxu0 0.0
          %428 = vmatpush1.msra.mxu0 0.0
          %429 = vmatprep.subr.mxu0 0.0
          %430 = vmatpush1.msra.mxu0 0.0
          %431 = vmatprep.mubr.f32.mxu0 0.0
          %432 = vmatmul.mubr.f32.gmra.mrb[0].mxu0 %v272
          %v433 = vpop.f32.mrb[0].mxu0
          %v434 = vadd.f32 0.0, %v433
          %v435 = vpop.f32.mrb[0].mxu0
          %436 = vmatprep.mubr.f32.mxu0 0.0
          %437 = vmatmul.mubr.f32.gmra.mrb[0].mxu0 %v273
          %v438 = vpop.f32.mrb[0].mxu0
          %v439 = vadd.f32 0.0, %v438
          %v440 = vpop.f32.mrb[0].mxu0
          %441 = vmatprep.mubr.f32.mxu0 0.0
          %442 = vmatmul.mubr.f32.gmra.mrb[0].mxu0 %v274
          %v443 = vpop.f32.mrb[0].mxu0
          %v444 = vadd.f32 0.0, %v443
          %v445 = vpop.f32.mrb[0].mxu0
          %446 = vmatprep.mubr.f32.mxu0 0.0
          %447 = vmatmul.mubr.f32.gmra.mrb[0].mxu0 %v275
          %v448 = vpop.f32.mrb[0].mxu0
          %v449 = vadd.f32 0.0, %v448
          %v450 = vpop.f32.mrb[0].mxu0
          %451 = vmatprep.mubr.f32.mxu0 0.0
          %452 = vmatmul.mubr.f32.gmra.mrb[0].mxu0 %v276
          %v453 = vpop.f32.mrb[0].mxu0
          %v454 = vadd.f32 0.0, %v453
          %v455 = vpop.f32.mrb[0].mxu0
          %456 = vmatprep.mubr.f32.mxu0 0.0
          %457 = vmatmul.mubr.f32.gmra.mrb[0].mxu0 %v277
          %v458 = vpop.f32.mrb[0].mxu0
          %v459 = vadd.f32 0.0, %v458
          %v460 = vpop.f32.mrb[0].mxu0
          %461 = vmatprep.mubr.f32.mxu0 0.0
          %462 = vmatmul.mubr.f32.gmra.mrb[0].mxu0 %v278
          %v463 = vpop.f32.mrb[0].mxu0
          %v464 = vadd.f32 0.0, %v463
          %v465 = vpop.f32.mrb[0].mxu0
          %466 = vmatprep.mubr.f32.mxu0 0.0
          %467 = vmatmul.mubr.f32.gmra.mrb[0].mxu0 %v279
          %v468 = vpop.f32.mrb[0].mxu0
          %v469 = vadd.f32 0.0, %v468
          %v470 = vpop.f32.mrb[0].mxu0
          %471 = vdwg.mxu0
          %v472 = vld [vmem:[%s239 + $0x40] sm:$0xff]
          %v473 = vld [vmem:[%s239 + $0x48] sm:$0xff]
          %v474 = vld [vmem:[%s239 + $0x50] sm:$0xff]
          %v475 = vld [vmem:[%s239 + $0x58] sm:$0xff]
          %v476 = vld [vmem:[%s239 + $0x60] sm:$0xff]
          %v477 = vld [vmem:[%s239 + $0x68] sm:$0xff]
          %v478 = vld [vmem:[%s239 + $0x70] sm:$0xff]
          %v479 = vld [vmem:[%s239 + $0x78] sm:$0xff]
          %480 = vmatprep.subr.mxu0 0.0
          %481 = vmatpush1.xpose.msra.mxu0 %v472
          %482 = vmatprep.subr.mxu0 0.0
          %483 = vmatpush1.xpose.msra.mxu0 %v473
          %484 = vmatprep.subr.mxu0 0.0
          %485 = vmatpush1.xpose.msra.mxu0 %v474
          %486 = vmatprep.subr.mxu0 0.0
          %487 = vmatpush1.xpose.msra.mxu0 %v475
          %488 = vmatprep.subr.mxu0 0.0
          %489 = vmatpush1.xpose.msra.mxu0 %v476
          %490 = vmatprep.subr.mxu0 0.0
          %491 = vmatpush1.xpose.msra.mxu0 %v477
          %492 = vmatprep.subr.mxu0 0.0
          %493 = vmatpush1.xpose.msra.mxu0 %v478
          %494 = vmatprep.subr.mxu0 0.0
          %495 = vmatpush1.xpose.msra.mxu0 %v479
          %496 = vmatprep.subr.mxu0 0.0
          %497 = vmatpush1.xpose.msra.mxu0 0.0
          %498 = vmatprep.subr.mxu0 0.0
          %499 = vmatpush1.xpose.msra.mxu0 0.0
          %500 = vmatprep.subr.mxu0 0.0
          %501 = vmatpush1.xpose.msra.mxu0 0.0
          %502 = vmatprep.subr.mxu0 0.0
          %503 = vmatpush1.xpose.msra.mxu0 0.0
          %504 = vmatprep.subr.mxu0 0.0
          %505 = vmatpush1.xpose.msra.mxu0 0.0
          %506 = vmatprep.subr.mxu0 0.0
          %507 = vmatpush1.xpose.msra.mxu0 0.0
          %508 = vmatprep.subr.mxu0 0.0
          %509 = vmatpush1.xpose.msra.mxu0 0.0
          %510 = vmatprep.subr.mxu0 0.0
          %511 = vmatpush1.xpose.msra.mxu0 0.0
          %512 = vmatprep.subr.mxu0 0.0
          %513 = vmatpush1.xpose.msra.mxu0 0.0
          %514 = vmatprep.subr.mxu0 0.0
          %515 = vmatpush1.xpose.msra.mxu0 0.0
          %516 = vmatprep.subr.mxu0 0.0
          %517 = vmatpush1.xpose.msra.mxu0 0.0
          %518 = vmatprep.subr.mxu0 0.0
          %519 = vmatpush1.xpose.msra.mxu0 0.0
          %520 = vmatprep.subr.mxu0 0.0
          %521 = vmatpush1.xpose.msra.mxu0 0.0
          %522 = vmatprep.subr.mxu0 0.0
          %523 = vmatpush1.xpose.msra.mxu0 0.0
          %524 = vmatprep.subr.mxu0 0.0
          %525 = vmatpush1.xpose.msra.mxu0 0.0
          %526 = vmatprep.subr.mxu0 0.0
          %527 = vmatpush1.xpose.msra.mxu0 0.0
          %528 = vmatprep.subr.mxu0 0.0
          %529 = vmatpush1.xpose.msra.mxu0 0.0
          %530 = vmatprep.subr.mxu0 0.0
          %531 = vmatpush1.xpose.msra.mxu0 0.0
          %532 = vmatprep.subr.mxu0 0.0
          %533 = vmatpush1.xpose.msra.mxu0 0.0
          %534 = vmatprep.subr.mxu0 0.0
          %535 = vmatpush1.xpose.msra.mxu0 0.0
          %536 = vmatprep.subr.mxu0 0.0
          %537 = vmatpush1.xpose.msra.mxu0 0.0
          %538 = vmatprep.subr.mxu0 0.0
          %539 = vmatpush1.xpose.msra.mxu0 0.0
          %540 = vmatprep.subr.mxu0 0.0
          %541 = vmatpush1.xpose.msra.mxu0 0.0
          %542 = vmatprep.subr.mxu0 0.0
          %543 = vmatpush1.xpose.msra.mxu0 0.0
          %544 = vmatprep.mubr.f32.mxu0 0.0
          %545 = vmatmul.mubr.f32.gmra.mrb[0].mxu0 %v280
          %v546 = vpop.f32.mrb[0].mxu0
          %v547 = vadd.f32 0.0, %v546
          %v548 = vpop.f32.mrb[0].mxu0
          %549 = vdwg.mxu0
          %550 = vmatprep.subr.mxu0 0.0
          %551 = vmatpush1.msra.mxu0 %v351
          %552 = vmatprep.subr.mxu0 0.0
          %553 = vmatpush1.msra.mxu0 %v352
          %554 = vmatprep.subr.mxu0 0.0
          %555 = vmatpush1.msra.mxu0 %v353
          %556 = vmatprep.subr.mxu0 0.0
          %557 = vmatpush1.msra.mxu0 %v354
          %558 = vmatprep.subr.mxu0 0.0
          %559 = vmatpush1.msra.mxu0 %v355
          %560 = vmatprep.subr.mxu0 0.0
          %561 = vmatpush1.msra.mxu0 %v356
          %562 = vmatprep.subr.mxu0 0.0
          %563 = vmatpush1.msra.mxu0 %v357
          %564 = vmatprep.subr.mxu0 0.0
          %565 = vmatpush1.msra.mxu0 %v358
          %566 = vmatprep.subr.mxu0 0.0
          %567 = vmatpush1.msra.mxu0 %v359
          %568 = vmatprep.subr.mxu0 0.0
          %569 = vmatpush1.msra.mxu0 %v360
          %570 = vmatprep.subr.mxu0 0.0
          %571 = vmatpush1.msra.mxu0 %v361
          %572 = vmatprep.subr.mxu0 0.0
          %573 = vmatpush1.msra.mxu0 %v362
          %574 = vmatprep.subr.mxu0 0.0
          %575 = vmatpush1.msra.mxu0 %v363
          %576 = vmatprep.subr.mxu0 0.0
          %577 = vmatpush1.msra.mxu0 %v364
          %578 = vmatprep.subr.mxu0 0.0
          %579 = vmatpush1.msra.mxu0 %v365
          %580 = vmatprep.subr.mxu0 0.0
          %581 = vmatpush1.msra.mxu0 %v366
          %582 = vmatprep.subr.mxu0 0.0
          %583 = vmatpush1.msra.mxu0 0.0
          %584 = vmatprep.subr.mxu0 0.0
          %585 = vmatpush1.msra.mxu0 0.0
          %586 = vmatprep.subr.mxu0 0.0
          %587 = vmatpush1.msra.mxu0 0.0
          %588 = vmatprep.subr.mxu0 0.0
          %589 = vmatpush1.msra.mxu0 0.0
          %590 = vmatprep.subr.mxu0 0.0
          %591 = vmatpush1.msra.mxu0 0.0
          %592 = vmatprep.subr.mxu0 0.0
          %593 = vmatpush1.msra.mxu0 0.0
          %594 = vmatprep.subr.mxu0 0.0
          %595 = vmatpush1.msra.mxu0 0.0
          %596 = vmatprep.subr.mxu0 0.0
          %597 = vmatpush1.msra.mxu0 0.0
          %598 = vmatprep.subr.mxu0 0.0
          %599 = vmatpush1.msra.mxu0 0.0
          %600 = vmatprep.subr.mxu0 0.0
          %601 = vmatpush1.msra.mxu0 0.0
          %602 = vmatprep.subr.mxu0 0.0
          %603 = vmatpush1.msra.mxu0 0.0
          %604 = vmatprep.subr.mxu0 0.0
          %605 = vmatpush1.msra.mxu0 0.0
          %606 = vmatprep.subr.mxu0 0.0
          %607 = vmatpush1.msra.mxu0 0.0
          %608 = vmatprep.subr.mxu0 0.0
          %609 = vmatpush1.msra.mxu0 0.0
          %610 = vmatprep.subr.mxu0 0.0
          %611 = vmatpush1.msra.mxu0 0.0
          %612 = vmatprep.subr.mxu0 0.0
          %613 = vmatpush1.msra.mxu0 0.0
          %614 = vmatprep.mubr.f32.mxu0 0.0
          %615 = vmatmul.mubr.f32.gmra.mrb[0].mxu0 %v472
          %v616 = vpop.f32.mrb[0].mxu0
          %v617 = vadd.f32 0.0, %v616
          %v618 = vpop.f32.mrb[0].mxu0
          %619 = vmatprep.mubr.f32.mxu0 0.0
          %620 = vmatmul.mubr.f32.gmra.mrb[0].mxu0 %v473
          %v621 = vpop.f32.mrb[0].mxu0
          %v622 = vadd.f32 0.0, %v621
          %v623 = vpop.f32.mrb[0].mxu0
          %624 = vmatprep.mubr.f32.mxu0 0.0
          %625 = vmatmul.mubr.f32.gmra.mrb[0].mxu0 %v474
          %v626 = vpop.f32.mrb[0].mxu0
          %v627 = vadd.f32 0.0, %v626
          %v628 = vpop.f32.mrb[0].mxu0
          %629 = vmatprep.mubr.f32.mxu0 0.0
          %630 = vmatmul.mubr.f32.gmra.mrb[0].mxu0 %v475
          %v631 = vpop.f32.mrb[0].mxu0
          %v632 = vadd.f32 0.0, %v631
          %v633 = vpop.f32.mrb[0].mxu0
          %634 = vmatprep.mubr.f32.mxu0 0.0
          %635 = vmatmul.mubr.f32.gmra.mrb[0].mxu0 %v476
          %v636 = vpop.f32.mrb[0].mxu0
          %v637 = vadd.f32 0.0, %v636
          %v638 = vpop.f32.mrb[0].mxu0
          %639 = vmatprep.mubr.f32.mxu0 0.0
          %640 = vmatmul.mubr.f32.gmra.mrb[0].mxu0 %v477
          %v641 = vpop.f32.mrb[0].mxu0
          %v642 = vadd.f32 0.0, %v641
          %v643 = vpop.f32.mrb[0].mxu0
          %644 = vmatprep.mubr.f32.mxu0 0.0
          %645 = vmatmul.mubr.f32.gmra.mrb[0].mxu0 %v478
          %v646 = vpop.f32.mrb[0].mxu0
          %v647 = vadd.f32 0.0, %v646
          %v648 = vpop.f32.mrb[0].mxu0
          %649 = vmatprep.mubr.f32.mxu0 0.0
          %650 = vmatmul.mubr.f32.gmra.mrb[0].mxu0 %v479
          %v651 = vpop.f32.mrb[0].mxu0
          %v652 = vadd.f32 0.0, %v651
          %v653 = vpop.f32.mrb[0].mxu0
          %654 = vdwg.mxu0
          %v655 = vmax.f32 %v348, %v547
          %v656 = vmax.f32 %v434, %v617
          %v657 = vmax.f32 %v439, %v622
          %v658 = vmax.f32 %v444, %v627
          %v659 = vmax.f32 %v449, %v632
          %v660 = vmax.f32 %v454, %v637
          %v661 = vmax.f32 %v459, %v642
          %v662 = vmax.f32 %v464, %v647
          %v663 = vmax.f32 %v469, %v652
          %v664 = vld [vmem:[%s239 + $0x80] sm:$0xff]
          %v665 = vld [vmem:[%s239 + $0x88] sm:$0xff]
          %v666 = vld [vmem:[%s239 + $0x90] sm:$0xff]
          %v667 = vld [vmem:[%s239 + $0x98] sm:$0xff]
          %v668 = vld [vmem:[%s239 + $0xa0] sm:$0xff]
          %v669 = vld [vmem:[%s239 + $0xa8] sm:$0xff]
          %v670 = vld [vmem:[%s239 + $0xb0] sm:$0xff]
          %v671 = vld [vmem:[%s239 + $0xb8] sm:$0xff]
          %672 = vmatprep.subr.mxu0 0.0
          %673 = vmatpush1.xpose.msra.mxu0 %v664
          %674 = vmatprep.subr.mxu0 0.0
          %675 = vmatpush1.xpose.msra.mxu0 %v665
          %676 = vmatprep.subr.mxu0 0.0
          %677 = vmatpush1.xpose.msra.mxu0 %v666
          %678 = vmatprep.subr.mxu0 0.0
          %679 = vmatpush1.xpose.msra.mxu0 %v667
          %680 = vmatprep.subr.mxu0 0.0
          %681 = vmatpush1.xpose.msra.mxu0 %v668
          %682 = vmatprep.subr.mxu0 0.0
          %683 = vmatpush1.xpose.msra.mxu0 %v669
          %684 = vmatprep.subr.mxu0 0.0
          %685 = vmatpush1.xpose.msra.mxu0 %v670
          %686 = vmatprep.subr.mxu0 0.0
          %687 = vmatpush1.xpose.msra.mxu0 %v671
          %688 = vmatprep.subr.mxu0 0.0
          %689 = vmatpush1.xpose.msra.mxu0 0.0
          %690 = vmatprep.subr.mxu0 0.0
          %691 = vmatpush1.xpose.msra.mxu0 0.0
          %692 = vmatprep.subr.mxu0 0.0
          %693 = vmatpush1.xpose.msra.mxu0 0.0
          %694 = vmatprep.subr.mxu0 0.0
          %695 = vmatpush1.xpose.msra.mxu0 0.0
          %696 = vmatprep.subr.mxu0 0.0
          %697 = vmatpush1.xpose.msra.mxu0 0.0
          %698 = vmatprep.subr.mxu0 0.0
          %699 = vmatpush1.xpose.msra.mxu0 0.0
          %700 = vmatprep.subr.mxu0 0.0
          %701 = vmatpush1.xpose.msra.mxu0 0.0
          %702 = vmatprep.subr.mxu0 0.0
          %703 = vmatpush1.xpose.msra.mxu0 0.0
          %704 = vmatprep.subr.mxu0 0.0
          %705 = vmatpush1.xpose.msra.mxu0 0.0
          %706 = vmatprep.subr.mxu0 0.0
          %707 = vmatpush1.xpose.msra.mxu0 0.0
          %708 = vmatprep.subr.mxu0 0.0
          %709 = vmatpush1.xpose.msra.mxu0 0.0
          %710 = vmatprep.subr.mxu0 0.0
          %711 = vmatpush1.xpose.msra.mxu0 0.0
          %712 = vmatprep.subr.mxu0 0.0
          %713 = vmatpush1.xpose.msra.mxu0 0.0
          %714 = vmatprep.subr.mxu0 0.0
          %715 = vmatpush1.xpose.msra.mxu0 0.0
          %716 = vmatprep.subr.mxu0 0.0
          %717 = vmatpush1.xpose.msra.mxu0 0.0
          %718 = vmatprep.subr.mxu0 0.0
          %719 = vmatpush1.xpose.msra.mxu0 0.0
          %720 = vmatprep.subr.mxu0 0.0
          %721 = vmatpush1.xpose.msra.mxu0 0.0
          %722 = vmatprep.subr.mxu0 0.0
          %723 = vmatpush1.xpose.msra.mxu0 0.0
          %724 = vmatprep.subr.mxu0 0.0
          %725 = vmatpush1.xpose.msra.mxu0 0.0
          %726 = vmatprep.subr.mxu0 0.0
          %727 = vmatpush1.xpose.msra.mxu0 0.0
          %728 = vmatprep.subr.mxu0 0.0
          %729 = vmatpush1.xpose.msra.mxu0 0.0
          %730 = vmatprep.subr.mxu0 0.0
          %731 = vmatpush1.xpose.msra.mxu0 0.0
          %732 = vmatprep.subr.mxu0 0.0
          %733 = vmatpush1.xpose.msra.mxu0 0.0
          %734 = vmatprep.subr.mxu0 0.0
          %735 = vmatpush1.xpose.msra.mxu0 0.0
          %736 = vmatprep.mubr.f32.mxu0 0.0
          %737 = vmatmul.mubr.f32.gmra.mrb[0].mxu0 %v280
          %v738 = vpop.f32.mrb[0].mxu0
          %v739 = vadd.f32 0.0, %v738
          %v740 = vpop.f32.mrb[0].mxu0
          %741 = vdwg.mxu0
          %742 = vmatprep.subr.mxu0 0.0
          %743 = vmatpush1.msra.mxu0 %v351
          %744 = vmatprep.subr.mxu0 0.0
          %745 = vmatpush1.msra.mxu0 %v352
          %746 = vmatprep.subr.mxu0 0.0
          %747 = vmatpush1.msra.mxu0 %v353
          %748 = vmatprep.subr.mxu0 0.0
          %749 = vmatpush1.msra.mxu0 %v354
          %750 = vmatprep.subr.mxu0 0.0
          %751 = vmatpush1.msra.mxu0 %v355
          %752 = vmatprep.subr.mxu0 0.0
          %753 = vmatpush1.msra.mxu0 %v356
          %754 = vmatprep.subr.mxu0 0.0
          %755 = vmatpush1.msra.mxu0 %v357
          %756 = vmatprep.subr.mxu0 0.0
          %757 = vmatpush1.msra.mxu0 %v358
          %758 = vmatprep.subr.mxu0 0.0
          %759 = vmatpush1.msra.mxu0 %v359
          %760 = vmatprep.subr.mxu0 0.0
          %761 = vmatpush1.msra.mxu0 %v360
          %762 = vmatprep.subr.mxu0 0.0
          %763 = vmatpush1.msra.mxu0 %v361
          %764 = vmatprep.subr.mxu0 0.0
          %765 = vmatpush1.msra.mxu0 %v362
          %766 = vmatprep.subr.mxu0 0.0
          %767 = vmatpush1.msra.mxu0 %v363
          %768 = vmatprep.subr.mxu0 0.0
          %769 = vmatpush1.msra.mxu0 %v364
          %770 = vmatprep.subr.mxu0 0.0
          %771 = vmatpush1.msra.mxu0 %v365
          %772 = vmatprep.subr.mxu0 0.0
          %773 = vmatpush1.msra.mxu0 %v366
          %774 = vmatprep.subr.mxu0 0.0
          %775 = vmatpush1.msra.mxu0 0.0
          %776 = vmatprep.subr.mxu0 0.0
          %777 = vmatpush1.msra.mxu0 0.0
          %778 = vmatprep.subr.mxu0 0.0
          %779 = vmatpush1.msra.mxu0 0.0
          %780 = vmatprep.subr.mxu0 0.0
          %781 = vmatpush1.msra.mxu0 0.0
          %782 = vmatprep.subr.mxu0 0.0
          %783 = vmatpush1.msra.mxu0 0.0
          %784 = vmatprep.subr.mxu0 0.0
          %785 = vmatpush1.msra.mxu0 0.0
          %786 = vmatprep.subr.mxu0 0.0
          %787 = vmatpush1.msra.mxu0 0.0
          %788 = vmatprep.subr.mxu0 0.0
          %789 = vmatpush1.msra.mxu0 0.0
          %790 = vmatprep.subr.mxu0 0.0
          %791 = vmatpush1.msra.mxu0 0.0
          %792 = vmatprep.subr.mxu0 0.0
          %793 = vmatpush1.msra.mxu0 0.0
          %794 = vmatprep.subr.mxu0 0.0
          %795 = vmatpush1.msra.mxu0 0.0
          %796 = vmatprep.subr.mxu0 0.0
          %797 = vmatpush1.msra.mxu0 0.0
          %798 = vmatprep.subr.mxu0 0.0
          %799 = vmatpush1.msra.mxu0 0.0
          %800 = vmatprep.subr.mxu0 0.0
          %801 = vmatpush1.msra.mxu0 0.0
          %802 = vmatprep.subr.mxu0 0.0
          %803 = vmatpush1.msra.mxu0 0.0
          %804 = vmatprep.subr.mxu0 0.0
          %805 = vmatpush1.msra.mxu0 0.0
          %806 = vmatprep.mubr.f32.mxu0 0.0
          %807 = vmatmul.mubr.f32.gmra.mrb[0].mxu0 %v664
          %v808 = vpop.f32.mrb[0].mxu0
          %v809 = vadd.f32 0.0, %v808
          %v810 = vpop.f32.mrb[0].mxu0
          %811 = vmatprep.mubr.f32.mxu0 0.0
          %812 = vmatmul.mubr.f32.gmra.mrb[0].mxu0 %v665
          %v813 = vpop.f32.mrb[0].mxu0
          %v814 = vadd.f32 0.0, %v813
          %v815 = vpop.f32.mrb[0].mxu0
          %816 = vmatprep.mubr.f32.mxu0 0.0
          %817 = vmatmul.mubr.f32.gmra.mrb[0].mxu0 %v666
          %v818 = vpop.f32.mrb[0].mxu0
          %v819 = vadd.f32 0.0, %v818
          %v820 = vpop.f32.mrb[0].mxu0
          %821 = vmatprep.mubr.f32.mxu0 0.0
          %822 = vmatmul.mubr.f32.gmra.mrb[0].mxu0 %v667
          %v823 = vpop.f32.mrb[0].mxu0
          %v824 = vadd.f32 0.0, %v823
          %v825 = vpop.f32.mrb[0].mxu0
          %826 = vmatprep.mubr.f32.mxu0 0.0
          %827 = vmatmul.mubr.f32.gmra.mrb[0].mxu0 %v668
          %v828 = vpop.f32.mrb[0].mxu0
          %v829 = vadd.f32 0.0, %v828
          %v830 = vpop.f32.mrb[0].mxu0
          %831 = vmatprep.mubr.f32.mxu0 0.0
          %832 = vmatmul.mubr.f32.gmra.mrb[0].mxu0 %v669
          %v833 = vpop.f32.mrb[0].mxu0
          %v834 = vadd.f32 0.0, %v833
          %v835 = vpop.f32.mrb[0].mxu0
          %836 = vmatprep.mubr.f32.mxu0 0.0
          %837 = vmatmul.mubr.f32.gmra.mrb[0].mxu0 %v670
          %v838 = vpop.f32.mrb[0].mxu0
          %v839 = vadd.f32 0.0, %v838
          %v840 = vpop.f32.mrb[0].mxu0
          %841 = vmatprep.mubr.f32.mxu0 0.0
          %842 = vmatmul.mubr.f32.gmra.mrb[0].mxu0 %v671
          %v843 = vpop.f32.mrb[0].mxu0
          %v844 = vadd.f32 0.0, %v843
          %v845 = vpop.f32.mrb[0].mxu0
          %846 = vdwg.mxu0
          %v847 = vmax.f32 %v655, %v739
          %v848 = vmax.f32 %v656, %v809
          %v849 = vmax.f32 %v657, %v814
          %v850 = vmax.f32 %v658, %v819
          %v851 = vmax.f32 %v659, %v824
          %v852 = vmax.f32 %v660, %v829
          %v853 = vmax.f32 %v661, %v834
          %v854 = vmax.f32 %v662, %v839
          %v855 = vmax.f32 %v663, %v844
          %v856 = vld [vmem:[%s239 + $0xc0] sm:$0xff]
          %v857 = vld [vmem:[%s239 + $0xc8] sm:$0xff]
          %v858 = vld [vmem:[%s239 + $0xd0] sm:$0xff]
          %v859 = vld [vmem:[%s239 + $0xd8] sm:$0xff]
          %v860 = vld [vmem:[%s239 + $0xe0] sm:$0xff]
          %v861 = vld [vmem:[%s239 + $0xe8] sm:$0xff]
          %v862 = vld [vmem:[%s239 + $0xf0] sm:$0xff]
          %v863 = vld [vmem:[%s239 + $0xf8] sm:$0xff]
          %864 = vmatprep.subr.mxu0 0.0
          %865 = vmatpush1.xpose.msra.mxu0 %v856
          %866 = vmatprep.subr.mxu0 0.0
          %867 = vmatpush1.xpose.msra.mxu0 %v857
          %868 = vmatprep.subr.mxu0 0.0
          %869 = vmatpush1.xpose.msra.mxu0 %v858
          %870 = vmatprep.subr.mxu0 0.0
          %871 = vmatpush1.xpose.msra.mxu0 %v859
          %872 = vmatprep.subr.mxu0 0.0
          %873 = vmatpush1.xpose.msra.mxu0 %v860
          %874 = vmatprep.subr.mxu0 0.0
          %875 = vmatpush1.xpose.msra.mxu0 %v861
          %876 = vmatprep.subr.mxu0 0.0
          %877 = vmatpush1.xpose.msra.mxu0 %v862
          %878 = vmatprep.subr.mxu0 0.0
          %879 = vmatpush1.xpose.msra.mxu0 %v863
          %880 = vmatprep.subr.mxu0 0.0
          %881 = vmatpush1.xpose.msra.mxu0 0.0
          %882 = vmatprep.subr.mxu0 0.0
          %883 = vmatpush1.xpose.msra.mxu0 0.0
          %884 = vmatprep.subr.mxu0 0.0
          %885 = vmatpush1.xpose.msra.mxu0 0.0
          %886 = vmatprep.subr.mxu0 0.0
          %887 = vmatpush1.xpose.msra.mxu0 0.0
          %888 = vmatprep.subr.mxu0 0.0
          %889 = vmatpush1.xpose.msra.mxu0 0.0
          %890 = vmatprep.subr.mxu0 0.0
          %891 = vmatpush1.xpose.msra.mxu0 0.0
          %892 = vmatprep.subr.mxu0 0.0
          %893 = vmatpush1.xpose.msra.mxu0 0.0
          %894 = vmatprep.subr.mxu0 0.0
          %895 = vmatpush1.xpose.msra.mxu0 0.0
          %896 = vmatprep.subr.mxu0 0.0
          %897 = vmatpush1.xpose.msra.mxu0 0.0
          %898 = vmatprep.subr.mxu0 0.0
          %899 = vmatpush1.xpose.msra.mxu0 0.0
          %900 = vmatprep.subr.mxu0 0.0
          %901 = vmatpush1.xpose.msra.mxu0 0.0
          %902 = vmatprep.subr.mxu0 0.0
          %903 = vmatpush1.xpose.msra.mxu0 0.0
          %904 = vmatprep.subr.mxu0 0.0
          %905 = vmatpush1.xpose.msra.mxu0 0.0
          %906 = vmatprep.subr.mxu0 0.0
          %907 = vmatpush1.xpose.msra.mxu0 0.0
          %908 = vmatprep.subr.mxu0 0.0
          %909 = vmatpush1.xpose.msra.mxu0 0.0
          %910 = vmatprep.subr.mxu0 0.0
          %911 = vmatpush1.xpose.msra.mxu0 0.0
          %912 = vmatprep.subr.mxu0 0.0
          %913 = vmatpush1.xpose.msra.mxu0 0.0
          %914 = vmatprep.subr.mxu0 0.0
          %915 = vmatpush1.xpose.msra.mxu0 0.0
          %916 = vmatprep.subr.mxu0 0.0
          %917 = vmatpush1.xpose.msra.mxu0 0.0
          %918 = vmatprep.subr.mxu0 0.0
          %919 = vmatpush1.xpose.msra.mxu0 0.0
          %920 = vmatprep.subr.mxu0 0.0
          %921 = vmatpush1.xpose.msra.mxu0 0.0
          %922 = vmatprep.subr.mxu0 0.0
          %923 = vmatpush1.xpose.msra.mxu0 0.0
          %924 = vmatprep.subr.mxu0 0.0
          %925 = vmatpush1.xpose.msra.mxu0 0.0
          %926 = vmatprep.subr.mxu0 0.0
          %927 = vmatpush1.xpose.msra.mxu0 0.0
          %928 = vmatprep.mubr.f32.mxu0 0.0
          %929 = vmatmul.mubr.f32.gmra.mrb[0].mxu0 %v280
          %v930 = vpop.f32.mrb[0].mxu0
          %v931 = vadd.f32 0.0, %v930
          %v932 = vpop.f32.mrb[0].mxu0
          %933 = vdwg.mxu0
          %934 = vmatprep.subr.mxu0 0.0
          %935 = vmatpush1.msra.mxu0 %v351
          %936 = vmatprep.subr.mxu0 0.0
          %937 = vmatpush1.msra.mxu0 %v352
          %938 = vmatprep.subr.mxu0 0.0
          %939 = vmatpush1.msra.mxu0 %v353
          %940 = vmatprep.subr.mxu0 0.0
          %941 = vmatpush1.msra.mxu0 %v354
          %942 = vmatprep.subr.mxu0 0.0
          %943 = vmatpush1.msra.mxu0 %v355
          %944 = vmatprep.subr.mxu0 0.0
          %945 = vmatpush1.msra.mxu0 %v356
          %946 = vmatprep.subr.mxu0 0.0
          %947 = vmatpush1.msra.mxu0 %v357
          %948 = vmatprep.subr.mxu0 0.0
          %949 = vmatpush1.msra.mxu0 %v358
          %950 = vmatprep.subr.mxu0 0.0
          %951 = vmatpush1.msra.mxu0 %v359
          %952 = vmatprep.subr.mxu0 0.0
          %953 = vmatpush1.msra.mxu0 %v360
          %954 = vmatprep.subr.mxu0 0.0
          %955 = vmatpush1.msra.mxu0 %v361
          %956 = vmatprep.subr.mxu0 0.0
          %957 = vmatpush1.msra.mxu0 %v362
          %958 = vmatprep.subr.mxu0 0.0
          %959 = vmatpush1.msra.mxu0 %v363
          %960 = vmatprep.subr.mxu0 0.0
          %961 = vmatpush1.msra.mxu0 %v364
          %962 = vmatprep.subr.mxu0 0.0
          %963 = vmatpush1.msra.mxu0 %v365
          %964 = vmatprep.subr.mxu0 0.0
          %965 = vmatpush1.msra.mxu0 %v366
          %966 = vmatprep.subr.mxu0 0.0
          %967 = vmatpush1.msra.mxu0 0.0
          %968 = vmatprep.subr.mxu0 0.0
          %969 = vmatpush1.msra.mxu0 0.0
          %970 = vmatprep.subr.mxu0 0.0
          %971 = vmatpush1.msra.mxu0 0.0
          %972 = vmatprep.subr.mxu0 0.0
          %973 = vmatpush1.msra.mxu0 0.0
          %974 = vmatprep.subr.mxu0 0.0
          %975 = vmatpush1.msra.mxu0 0.0
          %976 = vmatprep.subr.mxu0 0.0
          %977 = vmatpush1.msra.mxu0 0.0
          %978 = vmatprep.subr.mxu0 0.0
          %979 = vmatpush1.msra.mxu0 0.0
          %980 = vmatprep.subr.mxu0 0.0
          %981 = vmatpush1.msra.mxu0 0.0
          %982 = vmatprep.subr.mxu0 0.0
          %983 = vmatpush1.msra.mxu0 0.0
          %984 = vmatprep.subr.mxu0 0.0
          %985 = vmatpush1.msra.mxu0 0.0
          %986 = vmatprep.subr.mxu0 0.0
          %987 = vmatpush1.msra.mxu0 0.0
          %988 = vmatprep.subr.mxu0 0.0
          %989 = vmatpush1.msra.mxu0 0.0
          %990 = vmatprep.subr.mxu0 0.0
          %991 = vmatpush1.msra.mxu0 0.0
          %992 = vmatprep.subr.mxu0 0.0
          %993 = vmatpush1.msra.mxu0 0.0
          %994 = vmatprep.subr.mxu0 0.0
          %995 = vmatpush1.msra.mxu0 0.0
          %996 = vmatprep.subr.mxu0 0.0
          %997 = vmatpush1.msra.mxu0 0.0
          %998 = vmatprep.mubr.f32.mxu0 0.0
          %999 = vmatmul.mubr.f32.gmra.mrb[0].mxu0 %v856
          %v1000 = vpop.f32.mrb[0].mxu0
          %v1001 = vadd.f32 0.0, %v1000
          %v1002 = vpop.f32.mrb[0].mxu0
          %1003 = vmatprep.mubr.f32.mxu0 0.0
          %1004 = vmatmul.mubr.f32.gmra.mrb[0].mxu0 %v857
          %v1005 = vpop.f32.mrb[0].mxu0
          %v1006 = vadd.f32 0.0, %v1005
          %v1007 = vpop.f32.mrb[0].mxu0
          %1008 = vmatprep.mubr.f32.mxu0 0.0
          %1009 = vmatmul.mubr.f32.gmra.mrb[0].mxu0 %v858
          %v1010 = vpop.f32.mrb[0].mxu0
          %v1011 = vadd.f32 0.0, %v1010
          %v1012 = vpop.f32.mrb[0].mxu0
          %1013 = vmatprep.mubr.f32.mxu0 0.0
          %1014 = vmatmul.mubr.f32.gmra.mrb[0].mxu0 %v859
          %v1015 = vpop.f32.mrb[0].mxu0
          %v1016 = vadd.f32 0.0, %v1015
          %v1017 = vpop.f32.mrb[0].mxu0
          %1018 = vmatprep.mubr.f32.mxu0 0.0
          %1019 = vmatmul.mubr.f32.gmra.mrb[0].mxu0 %v860
          %v1020 = vpop.f32.mrb[0].mxu0
          %v1021 = vadd.f32 0.0, %v1020
          %v1022 = vpop.f32.mrb[0].mxu0
          %1023 = vmatprep.mubr.f32.mxu0 0.0
          %1024 = vmatmul.mubr.f32.gmra.mrb[0].mxu0 %v861
          %v1025 = vpop.f32.mrb[0].mxu0
          %v1026 = vadd.f32 0.0, %v1025
          %v1027 = vpop.f32.mrb[0].mxu0
          %1028 = vmatprep.mubr.f32.mxu0 0.0
          %1029 = vmatmul.mubr.f32.gmra.mrb[0].mxu0 %v862
          %v1030 = vpop.f32.mrb[0].mxu0
          %v1031 = vadd.f32 0.0, %v1030
          %v1032 = vpop.f32.mrb[0].mxu0
          %1033 = vmatprep.mubr.f32.mxu0 0.0
          %1034 = vmatmul.mubr.f32.gmra.mrb[0].mxu0 %v863
          %v1035 = vpop.f32.mrb[0].mxu0
          %v1036 = vadd.f32 0.0, %v1035
          %v1037 = vpop.f32.mrb[0].mxu0
          %1038 = vdwg.mxu0
          %v1039 = vmax.f32 %v847, %v931
          %v1040 = vmax.f32 %v848, %v1001
          %v1041 = vmax.f32 %v849, %v1006
          %v1042 = vmax.f32 %v850, %v1011
          %v1043 = vmax.f32 %v851, %v1016
          %v1044 = vmax.f32 %v852, %v1021
          %v1045 = vmax.f32 %v853, %v1026
          %v1046 = vmax.f32 %v854, %v1031
          %v1047 = vmax.f32 %v855, %v1036
          %vm1048 = vcmask 523264
          %1049 = vst.msk [vmem:[#allocation2] sm:$0xff] %vm1048, %v1039
          %vm1050 = vcmask 261120
          %1051 = vst.msk [vmem:[#allocation3] sm:$0xff] %vm1050, %v1040
          %1052 = vst.msk [vmem:[#allocation3 + $0x8] sm:$0xff] %vm1050, %v1041
          %1053 = vst.msk [vmem:[#allocation3 + $0x10] sm:$0xff] %vm1050, %v1042
          %1054 = vst.msk [vmem:[#allocation3 + $0x18] sm:$0xff] %vm1050, %v1043
          %1055 = vst.msk [vmem:[#allocation3 + $0x20] sm:$0xff] %vm1050, %v1044
          %1056 = vst.msk [vmem:[#allocation3 + $0x28] sm:$0xff] %vm1050, %v1045
          %1057 = vst.msk [vmem:[#allocation3 + $0x30] sm:$0xff] %vm1050, %v1046
          %1058 = vst.msk [vmem:[#allocation3 + $0x38] sm:$0xff] %vm1050, %v1047
        $region48: #{tpu_custom_call.1} parent=39 // pred_fallthru
          _
        %v1059 = vld [vmem:[%s239] sm:$0xff]
        %v1060 = vld [vmem:[%s239 + $0x8] sm:$0xff]
        %v1061 = vld [vmem:[%s239 + $0x10] sm:$0xff]
        %v1062 = vld [vmem:[%s239 + $0x18] sm:$0xff]
        %v1063 = vld [vmem:[%s239 + $0x20] sm:$0xff]
        %v1064 = vld [vmem:[%s239 + $0x28] sm:$0xff]
        %v1065 = vld [vmem:[%s239 + $0x30] sm:$0xff]
        %v1066 = vld [vmem:[%s239 + $0x38] sm:$0xff]
        %v1067 = vld [vmem:[%s239 + $0x40] sm:$0xff]
        %v1068 = vld [vmem:[%s239 + $0x48] sm:$0xff]
        %v1069 = vld [vmem:[%s239 + $0x50] sm:$0xff]
        %v1070 = vld [vmem:[%s239 + $0x58] sm:$0xff]
        %v1071 = vld [vmem:[%s239 + $0x60] sm:$0xff]
        %v1072 = vld [vmem:[%s239 + $0x68] sm:$0xff]
        %v1073 = vld [vmem:[%s239 + $0x70] sm:$0xff]
        %v1074 = vld [vmem:[%s239 + $0x78] sm:$0xff]
        %v1075 = vld [vmem:[%s239 + $0x80] sm:$0xff]
        %v1076 = vld [vmem:[%s239 + $0x88] sm:$0xff]
        %v1077 = vld [vmem:[%s239 + $0x90] sm:$0xff]
        %v1078 = vld [vmem:[%s239 + $0x98] sm:$0xff]
        %v1079 = vld [vmem:[%s239 + $0xa0] sm:$0xff]
        %v1080 = vld [vmem:[%s239 + $0xa8] sm:$0xff]
        %v1081 = vld [vmem:[%s239 + $0xb0] sm:$0xff]
        %v1082 = vld [vmem:[%s239 + $0xb8] sm:$0xff]
        %v1083 = vld [vmem:[%s239 + $0xc0] sm:$0xff]
        %v1084 = vld [vmem:[%s239 + $0xc8] sm:$0xff]
        %v1085 = vld [vmem:[%s239 + $0xd0] sm:$0xff]
        %v1086 = vld [vmem:[%s239 + $0xd8] sm:$0xff]
        %v1087 = vld [vmem:[%s239 + $0xe0] sm:$0xff]
        %v1088 = vld [vmem:[%s239 + $0xe8] sm:$0xff]
        %v1089 = vld [vmem:[%s239 + $0xf0] sm:$0xff]
        %v1090 = vld [vmem:[%s239 + $0xf8] sm:$0xff]
        %v1091 = vld [vmem:[%s1] sm:$0xff]
        %v1092 = vld [vmem:[%s1 + $0x8] sm:$0xff]
        %v1093 = vld [vmem:[%s1 + $0x10] sm:$0xff]
        %v1094 = vld [vmem:[%s1 + $0x18] sm:$0xff]
        %v1095 = vld [vmem:[%s1 + $0x20] sm:$0xff]
        %v1096 = vld [vmem:[%s1 + $0x28] sm:$0xff]
        %v1097 = vld [vmem:[%s1 + $0x30] sm:$0xff]
        %v1098 = vld [vmem:[%s1 + $0x38] sm:$0xff]
        %v1099 = vld [vmem:[%s1 + $0x40] sm:$0xff]
        %v1100 = vld [vmem:[%s1 + $0x48] sm:$0xff]
        %v1101 = vld [vmem:[%s1 + $0x50] sm:$0xff]
        %v1102 = vld [vmem:[%s1 + $0x58] sm:$0xff]
        %v1103 = vld [vmem:[%s1 + $0x60] sm:$0xff]
        %v1104 = vld [vmem:[%s1 + $0x68] sm:$0xff]
        %v1105 = vld [vmem:[%s1 + $0x70] sm:$0xff]
        %v1106 = vld [vmem:[%s1 + $0x78] sm:$0xff]
        %1107 = vmatprep.subr.mxu0 0.0
        %1108 = vmatpush1.msra.mxu0 %v1091
        %1109 = vmatprep.subr.mxu0 0.0
        %1110 = vmatpush1.msra.mxu0 %v1092
        %1111 = vmatprep.subr.mxu0 0.0
        %1112 = vmatpush1.msra.mxu0 %v1093
        %1113 = vmatprep.subr.mxu0 0.0
        %1114 = vmatpush1.msra.mxu0 %v1094
        %1115 = vmatprep.subr.mxu0 0.0
        %1116 = vmatpush1.msra.mxu0 %v1095
        %1117 = vmatprep.subr.mxu0 0.0
        %1118 = vmatpush1.msra.mxu0 %v1096
        %1119 = vmatprep.subr.mxu0 0.0
        %1120 = vmatpush1.msra.mxu0 %v1097
        %1121 = vmatprep.subr.mxu0 0.0
        %1122 = vmatpush1.msra.mxu0 %v1098
        %1123 = vmatprep.subr.mxu0 0.0
        %1124 = vmatpush1.msra.mxu0 %v1099
        %1125 = vmatprep.subr.mxu0 0.0
        %1126 = vmatpush1.msra.mxu0 %v1100
        %1127 = vmatprep.subr.mxu0 0.0
        %1128 = vmatpush1.msra.mxu0 %v1101
        %1129 = vmatprep.subr.mxu0 0.0
        %1130 = vmatpush1.msra.mxu0 %v1102
        %1131 = vmatprep.subr.mxu0 0.0
        %1132 = vmatpush1.msra.mxu0 %v1103
        %1133 = vmatprep.subr.mxu0 0.0
        %1134 = vmatpush1.msra.mxu0 %v1104
        %1135 = vmatprep.subr.mxu0 0.0
        %1136 = vmatpush1.msra.mxu0 %v1105
        %1137 = vmatprep.subr.mxu0 0.0
        %1138 = vmatpush1.msra.mxu0 %v1106
        %1139 = vmatprep.subr.mxu0 0.0
        %1140 = vmatpush1.msra.mxu0 0.0
        %1141 = vmatprep.subr.mxu0 0.0
        %1142 = vmatpush1.msra.mxu0 0.0
        %1143 = vmatprep.subr.mxu0 0.0
        %1144 = vmatpush1.msra.mxu0 0.0
        %1145 = vmatprep.subr.mxu0 0.0
        %1146 = vmatpush1.msra.mxu0 0.0
        %1147 = vmatprep.subr.mxu0 0.0
        %1148 = vmatpush1.msra.mxu0 0.0
        %1149 = vmatprep.subr.mxu0 0.0
        %1150 = vmatpush1.msra.mxu0 0.0
        %1151 = vmatprep.subr.mxu0 0.0
        %1152 = vmatpush1.msra.mxu0 0.0
        %1153 = vmatprep.subr.mxu0 0.0
        %1154 = vmatpush1.msra.mxu0 0.0
        %1155 = vmatprep.subr.mxu0 0.0
        %1156 = vmatpush1.msra.mxu0 0.0
        %1157 = vmatprep.subr.mxu0 0.0
        %1158 = vmatpush1.msra.mxu0 0.0
        %1159 = vmatprep.subr.mxu0 0.0
        %1160 = vmatpush1.msra.mxu0 0.0
        %1161 = vmatprep.subr.mxu0 0.0
        %1162 = vmatpush1.msra.mxu0 0.0
        %1163 = vmatprep.subr.mxu0 0.0
        %1164 = vmatpush1.msra.mxu0 0.0
        %1165 = vmatprep.subr.mxu0 0.0
        %1166 = vmatpush1.msra.mxu0 0.0
        %1167 = vmatprep.subr.mxu0 0.0
        %1168 = vmatpush1.msra.mxu0 0.0
        %1169 = vmatprep.subr.mxu0 0.0
        %1170 = vmatpush1.msra.mxu0 0.0
        %1171 = vmatprep.mubr.f32.mxu0 0.0
        %1172 = vmatmul.mubr.f32.gmra.mrb[0].mxu0 %v1059
        %v1173 = vpop.f32.mrb[0].mxu0
        %v1174 = vadd.f32 0.0, %v1173
        %v1175 = vpop.f32.mrb[0].mxu0
        %1176 = vmatprep.mubr.f32.mxu0 0.0
        %1177 = vmatmul.mubr.f32.gmra.mrb[0].mxu0 %v1060
        %v1178 = vpop.f32.mrb[0].mxu0
        %v1179 = vadd.f32 0.0, %v1178
        %v1180 = vpop.f32.mrb[0].mxu0
        %1181 = vmatprep.mubr.f32.mxu0 0.0
        %1182 = vmatmul.mubr.f32.gmra.mrb[0].mxu0 %v1061
        %v1183 = vpop.f32.mrb[0].mxu0
        %v1184 = vadd.f32 0.0, %v1183
        %v1185 = vpop.f32.mrb[0].mxu0
        %1186 = vmatprep.mubr.f32.mxu0 0.0
        %1187 = vmatmul.mubr.f32.gmra.mrb[0].mxu0 %v1062
        %v1188 = vpop.f32.mrb[0].mxu0
        %v1189 = vadd.f32 0.0, %v1188
        %v1190 = vpop.f32.mrb[0].mxu0
        %1191 = vmatprep.mubr.f32.mxu0 0.0
        %1192 = vmatmul.mubr.f32.gmra.mrb[0].mxu0 %v1063
        %v1193 = vpop.f32.mrb[0].mxu0
        %v1194 = vadd.f32 0.0, %v1193
        %v1195 = vpop.f32.mrb[0].mxu0
        %1196 = vmatprep.mubr.f32.mxu0 0.0
        %1197 = vmatmul.mubr.f32.gmra.mrb[0].mxu0 %v1064
        %v1198 = vpop.f32.mrb[0].mxu0
        %v1199 = vadd.f32 0.0, %v1198
        %v1200 = vpop.f32.mrb[0].mxu0
        %1201 = vmatprep.mubr.f32.mxu0 0.0
        %1202 = vmatmul.mubr.f32.gmra.mrb[0].mxu0 %v1065
        %v1203 = vpop.f32.mrb[0].mxu0
        %v1204 = vadd.f32 0.0, %v1203
        %v1205 = vpop.f32.mrb[0].mxu0
        %1206 = vmatprep.mubr.f32.mxu0 0.0
        %1207 = vmatmul.mubr.f32.gmra.mrb[0].mxu0 %v1066
        %v1208 = vpop.f32.mrb[0].mxu0
        %v1209 = vadd.f32 0.0, %v1208
        %v1210 = vpop.f32.mrb[0].mxu0
        %1211 = vmatprep.mubr.f32.mxu0 0.0
        %1212 = vmatmul.mubr.f32.gmra.mrb[0].mxu0 %v1067
        %v1213 = vpop.f32.mrb[0].mxu0
        %v1214 = vadd.f32 0.0, %v1213
        %v1215 = vpop.f32.mrb[0].mxu0
        %1216 = vmatprep.mubr.f32.mxu0 0.0
        %1217 = vmatmul.mubr.f32.gmra.mrb[0].mxu0 %v1068
        %v1218 = vpop.f32.mrb[0].mxu0
        %v1219 = vadd.f32 0.0, %v1218
        %v1220 = vpop.f32.mrb[0].mxu0
        %1221 = vmatprep.mubr.f32.mxu0 0.0
        %1222 = vmatmul.mubr.f32.gmra.mrb[0].mxu0 %v1069
        %v1223 = vpop.f32.mrb[0].mxu0
        %v1224 = vadd.f32 0.0, %v1223
        %v1225 = vpop.f32.mrb[0].mxu0
        %1226 = vmatprep.mubr.f32.mxu0 0.0
        %1227 = vmatmul.mubr.f32.gmra.mrb[0].mxu0 %v1070
        %v1228 = vpop.f32.mrb[0].mxu0
        %v1229 = vadd.f32 0.0, %v1228
        %v1230 = vpop.f32.mrb[0].mxu0
        %1231 = vmatprep.mubr.f32.mxu0 0.0
        %1232 = vmatmul.mubr.f32.gmra.mrb[0].mxu0 %v1071
        %v1233 = vpop.f32.mrb[0].mxu0
        %v1234 = vadd.f32 0.0, %v1233
        %v1235 = vpop.f32.mrb[0].mxu0
        %1236 = vmatprep.mubr.f32.mxu0 0.0
        %1237 = vmatmul.mubr.f32.gmra.mrb[0].mxu0 %v1072
        %v1238 = vpop.f32.mrb[0].mxu0
        %v1239 = vadd.f32 0.0, %v1238
        %v1240 = vpop.f32.mrb[0].mxu0
        %1241 = vmatprep.mubr.f32.mxu0 0.0
        %1242 = vmatmul.mubr.f32.gmra.mrb[0].mxu0 %v1073
        %v1243 = vpop.f32.mrb[0].mxu0
        %v1244 = vadd.f32 0.0, %v1243
        %v1245 = vpop.f32.mrb[0].mxu0
        %1246 = vmatprep.mubr.f32.mxu0 0.0
        %1247 = vmatmul.mubr.f32.gmra.mrb[0].mxu0 %v1074
        %v1248 = vpop.f32.mrb[0].mxu0
        %v1249 = vadd.f32 0.0, %v1248
        %v1250 = vpop.f32.mrb[0].mxu0
        %1251 = vmatprep.mubr.f32.mxu0 0.0
        %1252 = vmatmul.mubr.f32.gmra.mrb[0].mxu0 %v1075
        %v1253 = vpop.f32.mrb[0].mxu0
        %v1254 = vadd.f32 0.0, %v1253
        %v1255 = vpop.f32.mrb[0].mxu0
        %1256 = vmatprep.mubr.f32.mxu0 0.0
        %1257 = vmatmul.mubr.f32.gmra.mrb[0].mxu0 %v1076
        %v1258 = vpop.f32.mrb[0].mxu0
        %v1259 = vadd.f32 0.0, %v1258
        %v1260 = vpop.f32.mrb[0].mxu0
        %1261 = vmatprep.mubr.f32.mxu0 0.0
        %1262 = vmatmul.mubr.f32.gmra.mrb[0].mxu0 %v1077
        %v1263 = vpop.f32.mrb[0].mxu0
        %v1264 = vadd.f32 0.0, %v1263
        %v1265 = vpop.f32.mrb[0].mxu0
        %1266 = vmatprep.mubr.f32.mxu0 0.0
        %1267 = vmatmul.mubr.f32.gmra.mrb[0].mxu0 %v1078
        %v1268 = vpop.f32.mrb[0].mxu0
        %v1269 = vadd.f32 0.0, %v1268
        %v1270 = vpop.f32.mrb[0].mxu0
        %1271 = vmatprep.mubr.f32.mxu0 0.0
        %1272 = vmatmul.mubr.f32.gmra.mrb[0].mxu0 %v1079
        %v1273 = vpop.f32.mrb[0].mxu0
        %v1274 = vadd.f32 0.0, %v1273
        %v1275 = vpop.f32.mrb[0].mxu0
        %1276 = vmatprep.mubr.f32.mxu0 0.0
        %1277 = vmatmul.mubr.f32.gmra.mrb[0].mxu0 %v1080
        %v1278 = vpop.f32.mrb[0].mxu0
        %v1279 = vadd.f32 0.0, %v1278
        %v1280 = vpop.f32.mrb[0].mxu0
        %1281 = vmatprep.mubr.f32.mxu0 0.0
        %1282 = vmatmul.mubr.f32.gmra.mrb[0].mxu0 %v1081
        %v1283 = vpop.f32.mrb[0].mxu0
        %v1284 = vadd.f32 0.0, %v1283
        %v1285 = vpop.f32.mrb[0].mxu0
        %1286 = vmatprep.mubr.f32.mxu0 0.0
        %1287 = vmatmul.mubr.f32.gmra.mrb[0].mxu0 %v1082
        %v1288 = vpop.f32.mrb[0].mxu0
        %v1289 = vadd.f32 0.0, %v1288
        %v1290 = vpop.f32.mrb[0].mxu0
        %1291 = vmatprep.mubr.f32.mxu0 0.0
        %1292 = vmatmul.mubr.f32.gmra.mrb[0].mxu0 %v1083
        %v1293 = vpop.f32.mrb[0].mxu0
        %v1294 = vadd.f32 0.0, %v1293
        %v1295 = vpop.f32.mrb[0].mxu0
        %1296 = vmatprep.mubr.f32.mxu0 0.0
        %1297 = vmatmul.mubr.f32.gmra.mrb[0].mxu0 %v1084
        %v1298 = vpop.f32.mrb[0].mxu0
        %v1299 = vadd.f32 0.0, %v1298
        %v1300 = vpop.f32.mrb[0].mxu0
        %1301 = vmatprep.mubr.f32.mxu0 0.0
        %1302 = vmatmul.mubr.f32.gmra.mrb[0].mxu0 %v1085
        %v1303 = vpop.f32.mrb[0].mxu0
        %v1304 = vadd.f32 0.0, %v1303
        %v1305 = vpop.f32.mrb[0].mxu0
        %1306 = vmatprep.mubr.f32.mxu0 0.0
        %1307 = vmatmul.mubr.f32.gmra.mrb[0].mxu0 %v1086
        %v1308 = vpop.f32.mrb[0].mxu0
        %v1309 = vadd.f32 0.0, %v1308
        %v1310 = vpop.f32.mrb[0].mxu0
        %1311 = vmatprep.mubr.f32.mxu0 0.0
        %1312 = vmatmul.mubr.f32.gmra.mrb[0].mxu0 %v1087
        %v1313 = vpop.f32.mrb[0].mxu0
        %v1314 = vadd.f32 0.0, %v1313
        %v1315 = vpop.f32.mrb[0].mxu0
        %1316 = vmatprep.mubr.f32.mxu0 0.0
        %1317 = vmatmul.mubr.f32.gmra.mrb[0].mxu0 %v1088
        %v1318 = vpop.f32.mrb[0].mxu0
        %v1319 = vadd.f32 0.0, %v1318
        %v1320 = vpop.f32.mrb[0].mxu0
        %1321 = vmatprep.mubr.f32.mxu0 0.0
        %1322 = vmatmul.mubr.f32.gmra.mrb[0].mxu0 %v1089
        %v1323 = vpop.f32.mrb[0].mxu0
        %v1324 = vadd.f32 0.0, %v1323
        %v1325 = vpop.f32.mrb[0].mxu0
        %1326 = vmatprep.mubr.f32.mxu0 0.0
        %1327 = vmatmul.mubr.f32.gmra.mrb[0].mxu0 %v1090
        %v1328 = vpop.f32.mrb[0].mxu0
        %v1329 = vadd.f32 0.0, %v1328
        %v1330 = vpop.f32.mrb[0].mxu0
        %1331 = vdwg.mxu0
        %v1332 = vld [vmem:[#allocation2] sm:$0xff]
        %vm1333 = vcmask 64512
        %v1335 = vsel %vm1333, %v1174, 0
        %v1338 = vsel %vm1333, %v1179, 0
        %v1341 = vsel %vm1333, %v1184, 0
        %v1344 = vsel %vm1333, %v1189, 0
        %v1347 = vsel %vm1333, %v1194, 0
        %v1350 = vsel %vm1333, %v1199, 0
        %v1353 = vsel %vm1333, %v1204, 0
        %v1356 = vsel %vm1333, %v1209, 0
        %v1359 = vsel %vm1333, %v1214, 0
        %v1362 = vsel %vm1333, %v1219, 0
        %v1365 = vsel %vm1333, %v1224, 0
        %v1368 = vsel %vm1333, %v1229, 0
        %v1371 = vsel %vm1333, %v1234, 0
        %v1374 = vsel %vm1333, %v1239, 0
        %v1377 = vsel %vm1333, %v1244, 0
        %v1380 = vsel %vm1333, %v1249, 0
        %v1383 = vsel %vm1333, %v1254, 0
        %v1386 = vsel %vm1333, %v1259, 0
        %v1389 = vsel %vm1333, %v1264, 0
        %v1392 = vsel %vm1333, %v1269, 0
        %v1395 = vsel %vm1333, %v1274, 0
        %v1398 = vsel %vm1333, %v1279, 0
        %v1401 = vsel %vm1333, %v1284, 0
        %v1404 = vsel %vm1333, %v1289, 0
        %v1407 = vsel %vm1333, %v1294, 0
        %v1410 = vsel %vm1333, %v1299, 0
        %v1413 = vsel %vm1333, %v1304, 0
        %v1416 = vsel %vm1333, %v1309, 0
        %v1419 = vsel %vm1333, %v1314, 0
        %v1422 = vsel %vm1333, %v1319, 0
        %v1425 = vsel %vm1333, %v1324, 0
        %v1428 = vsel %vm1333, %v1329, 0
        %1430 = vmatprep.subr.mxu0 0.0
        %1431 = vmatpush1.msra.mxu0 %v1332
        %1432 = vmatprep.subr.mxu0 0.0
        %1433 = vmatpush1.msra.mxu0 0.0
        %1434 = vmatprep.subr.mxu0 0.0
        %1435 = vmatpush1.msra.mxu0 0.0
        %1436 = vmatprep.subr.mxu0 0.0
        %1437 = vmatpush1.msra.mxu0 0.0
        %1438 = vmatprep.subr.mxu0 0.0
        %1439 = vmatpush1.msra.mxu0 0.0
        %1440 = vmatprep.subr.mxu0 0.0
        %1441 = vmatpush1.msra.mxu0 0.0
        %1442 = vmatprep.subr.mxu0 0.0
        %1443 = vmatpush1.msra.mxu0 0.0
        %1444 = vmatprep.subr.mxu0 0.0
        %1445 = vmatpush1.msra.mxu0 0.0
        %1446 = vmatprep.subr.mxu0 0.0
        %1447 = vmatpush1.msra.mxu0 0.0
        %1448 = vmatprep.subr.mxu0 0.0
        %1449 = vmatpush1.msra.mxu0 0.0
        %1450 = vmatprep.subr.mxu0 0.0
        %1451 = vmatpush1.msra.mxu0 0.0
        %1452 = vmatprep.subr.mxu0 0.0
        %1453 = vmatpush1.msra.mxu0 0.0
        %1454 = vmatprep.subr.mxu0 0.0
        %1455 = vmatpush1.msra.mxu0 0.0
        %1456 = vmatprep.subr.mxu0 0.0
        %1457 = vmatpush1.msra.mxu0 0.0
        %1458 = vmatprep.subr.mxu0 0.0
        %1459 = vmatpush1.msra.mxu0 0.0
        %1460 = vmatprep.subr.mxu0 0.0
        %1461 = vmatpush1.msra.mxu0 0.0
        %1462 = vmatprep.subr.mxu0 0.0
        %1463 = vmatpush1.msra.mxu0 0.0
        %1464 = vmatprep.subr.mxu0 0.0
        %1465 = vmatpush1.msra.mxu0 0.0
        %1466 = vmatprep.subr.mxu0 0.0
        %1467 = vmatpush1.msra.mxu0 0.0
        %1468 = vmatprep.subr.mxu0 0.0
        %1469 = vmatpush1.msra.mxu0 0.0
        %1470 = vmatprep.subr.mxu0 0.0
        %1471 = vmatpush1.msra.mxu0 0.0
        %1472 = vmatprep.subr.mxu0 0.0
        %1473 = vmatpush1.msra.mxu0 0.0
        %1474 = vmatprep.subr.mxu0 0.0
        %1475 = vmatpush1.msra.mxu0 0.0
        %1476 = vmatprep.subr.mxu0 0.0
        %1477 = vmatpush1.msra.mxu0 0.0
        %1478 = vmatprep.subr.mxu0 0.0
        %1479 = vmatpush1.msra.mxu0 0.0
        %1480 = vmatprep.subr.mxu0 0.0
        %1481 = vmatpush1.msra.mxu0 0.0
        %1482 = vmatprep.subr.mxu0 0.0
        %1483 = vmatpush1.msra.mxu0 0.0
        %1484 = vmatprep.subr.mxu0 0.0
        %1485 = vmatpush1.msra.mxu0 0.0
        %1486 = vmatprep.subr.mxu0 0.0
        %1487 = vmatpush1.msra.mxu0 0.0
        %1488 = vmatprep.subr.mxu0 0.0
        %1489 = vmatpush1.msra.mxu0 0.0
        %1490 = vmatprep.subr.mxu0 0.0
        %1491 = vmatpush1.msra.mxu0 0.0
        %1492 = vmatprep.subr.mxu0 0.0
        %1493 = vmatpush1.msra.mxu0 0.0
        %1494 = vmatprep.mubr.f32.mxu0 0.0
        %1495 = vmatmul.mubr.f32.gmra.mrb[0].mxu0 %v1335
        %v1496 = vpop.f32.mrb[0].mxu0
        %v1497 = vadd.f32 0.0, %v1496
        %v1498 = vpop.f32.mrb[0].mxu0
        %1499 = vmatprep.mubr.f32.mxu0 0.0
        %1500 = vmatmul.mubr.f32.gmra.mrb[0].mxu0 %v1338
        %v1501 = vpop.f32.mrb[0].mxu0
        %v1502 = vadd.f32 0.0, %v1501
        %v1503 = vpop.f32.mrb[0].mxu0
        %1504 = vmatprep.mubr.f32.mxu0 0.0
        %1505 = vmatmul.mubr.f32.gmra.mrb[0].mxu0 %v1341
        %v1506 = vpop.f32.mrb[0].mxu0
        %v1507 = vadd.f32 0.0, %v1506
        %v1508 = vpop.f32.mrb[0].mxu0
        %1509 = vmatprep.mubr.f32.mxu0 0.0
        %1510 = vmatmul.mubr.f32.gmra.mrb[0].mxu0 %v1344
        %v1511 = vpop.f32.mrb[0].mxu0
        %v1512 = vadd.f32 0.0, %v1511
        %v1513 = vpop.f32.mrb[0].mxu0
        %1514 = vmatprep.mubr.f32.mxu0 0.0
        %1515 = vmatmul.mubr.f32.gmra.mrb[0].mxu0 %v1347
        %v1516 = vpop.f32.mrb[0].mxu0
        %v1517 = vadd.f32 0.0, %v1516
        %v1518 = vpop.f32.mrb[0].mxu0
        %1519 = vmatprep.mubr.f32.mxu0 0.0
        %1520 = vmatmul.mubr.f32.gmra.mrb[0].mxu0 %v1350
        %v1521 = vpop.f32.mrb[0].mxu0
        %v1522 = vadd.f32 0.0, %v1521
        %v1523 = vpop.f32.mrb[0].mxu0
        %1524 = vmatprep.mubr.f32.mxu0 0.0
        %1525 = vmatmul.mubr.f32.gmra.mrb[0].mxu0 %v1353
        %v1526 = vpop.f32.mrb[0].mxu0
        %v1527 = vadd.f32 0.0, %v1526
        %v1528 = vpop.f32.mrb[0].mxu0
        %1529 = vmatprep.mubr.f32.mxu0 0.0
        %1530 = vmatmul.mubr.f32.gmra.mrb[0].mxu0 %v1356
        %v1531 = vpop.f32.mrb[0].mxu0
        %v1532 = vadd.f32 0.0, %v1531
        %v1533 = vpop.f32.mrb[0].mxu0
        %1534 = vmatprep.mubr.f32.mxu0 0.0
        %1535 = vmatmul.mubr.f32.gmra.mrb[0].mxu0 %v1359
        %v1536 = vpop.f32.mrb[0].mxu0
        %v1537 = vadd.f32 0.0, %v1536
        %v1538 = vpop.f32.mrb[0].mxu0
        %1539 = vmatprep.mubr.f32.mxu0 0.0
        %1540 = vmatmul.mubr.f32.gmra.mrb[0].mxu0 %v1362
        %v1541 = vpop.f32.mrb[0].mxu0
        %v1542 = vadd.f32 0.0, %v1541
        %v1543 = vpop.f32.mrb[0].mxu0
        %1544 = vmatprep.mubr.f32.mxu0 0.0
        %1545 = vmatmul.mubr.f32.gmra.mrb[0].mxu0 %v1365
        %v1546 = vpop.f32.mrb[0].mxu0
        %v1547 = vadd.f32 0.0, %v1546
        %v1548 = vpop.f32.mrb[0].mxu0
        %1549 = vmatprep.mubr.f32.mxu0 0.0
        %1550 = vmatmul.mubr.f32.gmra.mrb[0].mxu0 %v1368
        %v1551 = vpop.f32.mrb[0].mxu0
        %v1552 = vadd.f32 0.0, %v1551
        %v1553 = vpop.f32.mrb[0].mxu0
        %1554 = vmatprep.mubr.f32.mxu0 0.0
        %1555 = vmatmul.mubr.f32.gmra.mrb[0].mxu0 %v1371
        %v1556 = vpop.f32.mrb[0].mxu0
        %v1557 = vadd.f32 0.0, %v1556
        %v1558 = vpop.f32.mrb[0].mxu0
        %1559 = vmatprep.mubr.f32.mxu0 0.0
        %1560 = vmatmul.mubr.f32.gmra.mrb[0].mxu0 %v1374
        %v1561 = vpop.f32.mrb[0].mxu0
        %v1562 = vadd.f32 0.0, %v1561
        %v1563 = vpop.f32.mrb[0].mxu0
        %1564 = vmatprep.mubr.f32.mxu0 0.0
        %1565 = vmatmul.mubr.f32.gmra.mrb[0].mxu0 %v1377
        %v1566 = vpop.f32.mrb[0].mxu0
        %v1567 = vadd.f32 0.0, %v1566
        %v1568 = vpop.f32.mrb[0].mxu0
        %1569 = vmatprep.mubr.f32.mxu0 0.0
        %1570 = vmatmul.mubr.f32.gmra.mrb[0].mxu0 %v1380
        %v1571 = vpop.f32.mrb[0].mxu0
        %v1572 = vadd.f32 0.0, %v1571
        %v1573 = vpop.f32.mrb[0].mxu0
        %1574 = vmatprep.mubr.f32.mxu0 0.0
        %1575 = vmatmul.mubr.f32.gmra.mrb[0].mxu0 %v1383
        %v1576 = vpop.f32.mrb[0].mxu0
        %v1577 = vadd.f32 0.0, %v1576
        %v1578 = vpop.f32.mrb[0].mxu0
        %1579 = vmatprep.mubr.f32.mxu0 0.0
        %1580 = vmatmul.mubr.f32.gmra.mrb[0].mxu0 %v1386
        %v1581 = vpop.f32.mrb[0].mxu0
        %v1582 = vadd.f32 0.0, %v1581
        %v1583 = vpop.f32.mrb[0].mxu0
        %1584 = vmatprep.mubr.f32.mxu0 0.0
        %1585 = vmatmul.mubr.f32.gmra.mrb[0].mxu0 %v1389
        %v1586 = vpop.f32.mrb[0].mxu0
        %v1587 = vadd.f32 0.0, %v1586
        %v1588 = vpop.f32.mrb[0].mxu0
        %1589 = vmatprep.mubr.f32.mxu0 0.0
        %1590 = vmatmul.mubr.f32.gmra.mrb[0].mxu0 %v1392
        %v1591 = vpop.f32.mrb[0].mxu0
        %v1592 = vadd.f32 0.0, %v1591
        %v1593 = vpop.f32.mrb[0].mxu0
        %1594 = vmatprep.mubr.f32.mxu0 0.0
        %1595 = vmatmul.mubr.f32.gmra.mrb[0].mxu0 %v1395
        %v1596 = vpop.f32.mrb[0].mxu0
        %v1597 = vadd.f32 0.0, %v1596
        %v1598 = vpop.f32.mrb[0].mxu0
        %1599 = vmatprep.mubr.f32.mxu0 0.0
        %1600 = vmatmul.mubr.f32.gmra.mrb[0].mxu0 %v1398
        %v1601 = vpop.f32.mrb[0].mxu0
        %v1602 = vadd.f32 0.0, %v1601
        %v1603 = vpop.f32.mrb[0].mxu0
        %1604 = vmatprep.mubr.f32.mxu0 0.0
        %1605 = vmatmul.mubr.f32.gmra.mrb[0].mxu0 %v1401
        %v1606 = vpop.f32.mrb[0].mxu0
        %v1607 = vadd.f32 0.0, %v1606
        %v1608 = vpop.f32.mrb[0].mxu0
        %1609 = vmatprep.mubr.f32.mxu0 0.0
        %1610 = vmatmul.mubr.f32.gmra.mrb[0].mxu0 %v1404
        %v1611 = vpop.f32.mrb[0].mxu0
        %v1612 = vadd.f32 0.0, %v1611
        %v1613 = vpop.f32.mrb[0].mxu0
        %1614 = vmatprep.mubr.f32.mxu0 0.0
        %1615 = vmatmul.mubr.f32.gmra.mrb[0].mxu0 %v1407
        %v1616 = vpop.f32.mrb[0].mxu0
        %v1617 = vadd.f32 0.0, %v1616
        %v1618 = vpop.f32.mrb[0].mxu0
        %1619 = vmatprep.mubr.f32.mxu0 0.0
        %1620 = vmatmul.mubr.f32.gmra.mrb[0].mxu0 %v1410
        %v1621 = vpop.f32.mrb[0].mxu0
        %v1622 = vadd.f32 0.0, %v1621
        %v1623 = vpop.f32.mrb[0].mxu0
        %1624 = vmatprep.mubr.f32.mxu0 0.0
        %1625 = vmatmul.mubr.f32.gmra.mrb[0].mxu0 %v1413
        %v1626 = vpop.f32.mrb[0].mxu0
        %v1627 = vadd.f32 0.0, %v1626
        %v1628 = vpop.f32.mrb[0].mxu0
        %1629 = vmatprep.mubr.f32.mxu0 0.0
        %1630 = vmatmul.mubr.f32.gmra.mrb[0].mxu0 %v1416
        %v1631 = vpop.f32.mrb[0].mxu0
        %v1632 = vadd.f32 0.0, %v1631
        %v1633 = vpop.f32.mrb[0].mxu0
        %1634 = vmatprep.mubr.f32.mxu0 0.0
        %1635 = vmatmul.mubr.f32.gmra.mrb[0].mxu0 %v1419
        %v1636 = vpop.f32.mrb[0].mxu0
        %v1637 = vadd.f32 0.0, %v1636
        %v1638 = vpop.f32.mrb[0].mxu0
        %1639 = vmatprep.mubr.f32.mxu0 0.0
        %1640 = vmatmul.mubr.f32.gmra.mrb[0].mxu0 %v1422
        %v1641 = vpop.f32.mrb[0].mxu0
        %v1642 = vadd.f32 0.0, %v1641
        %v1643 = vpop.f32.mrb[0].mxu0
        %1644 = vmatprep.mubr.f32.mxu0 0.0
        %1645 = vmatmul.mubr.f32.gmra.mrb[0].mxu0 %v1425
        %v1646 = vpop.f32.mrb[0].mxu0
        %v1647 = vadd.f32 0.0, %v1646
        %v1648 = vpop.f32.mrb[0].mxu0
        %1649 = vmatprep.mubr.f32.mxu0 0.0
        %1650 = vmatmul.mubr.f32.gmra.mrb[0].mxu0 %v1428
        %v1651 = vpop.f32.mrb[0].mxu0
        %v1652 = vadd.f32 0.0, %v1651
        %v1653 = vpop.f32.mrb[0].mxu0
        %1654 = vdwg.mxu0
        %vm1655 = vcmask 523264
        %v1656 = vsel %vm1655, %v1497, -inf
        %1657 = vmax.xlane.f32.xlu0 %v1656
        %v1658 = vpop.xlane.xlu0 %1657
        %v1659 = vsel %vm1655, %v1502, -inf
        %1660 = vmax.xlane.f32.xlu0 %v1659
        %v1661 = vpop.xlane.xlu0 %1660
        %v1662 = vsel %vm1655, %v1507, -inf
        %1663 = vmax.xlane.f32.xlu0 %v1662
        %v1664 = vpop.xlane.xlu0 %1663
        %v1665 = vsel %vm1655, %v1512, -inf
        %1666 = vmax.xlane.f32.xlu0 %v1665
        %v1667 = vpop.xlane.xlu0 %1666
        %v1668 = vsel %vm1655, %v1517, -inf
        %1669 = vmax.xlane.f32.xlu0 %v1668
        %v1670 = vpop.xlane.xlu0 %1669
        %v1671 = vsel %vm1655, %v1522, -inf
        %1672 = vmax.xlane.f32.xlu0 %v1671
        %v1673 = vpop.xlane.xlu0 %1672
        %v1674 = vsel %vm1655, %v1527, -inf
        %1675 = vmax.xlane.f32.xlu0 %v1674
        %v1676 = vpop.xlane.xlu0 %1675
        %v1677 = vsel %vm1655, %v1532, -inf
        %1678 = vmax.xlane.f32.xlu0 %v1677
        %v1679 = vpop.xlane.xlu0 %1678
        %v1680 = vsel %vm1655, %v1537, -inf
        %1681 = vmax.xlane.f32.xlu0 %v1680
        %v1682 = vpop.xlane.xlu0 %1681
        %v1683 = vsel %vm1655, %v1542, -inf
        %1684 = vmax.xlane.f32.xlu0 %v1683
        %v1685 = vpop.xlane.xlu0 %1684
        %v1686 = vsel %vm1655, %v1547, -inf
        %1687 = vmax.xlane.f32.xlu0 %v1686
        %v1688 = vpop.xlane.xlu0 %1687
        %v1689 = vsel %vm1655, %v1552, -inf
        %1690 = vmax.xlane.f32.xlu0 %v1689
        %v1691 = vpop.xlane.xlu0 %1690
        %v1692 = vsel %vm1655, %v1557, -inf
        %1693 = vmax.xlane.f32.xlu0 %v1692
        %v1694 = vpop.xlane.xlu0 %1693
        %v1695 = vsel %vm1655, %v1562, -inf
        %1696 = vmax.xlane.f32.xlu0 %v1695
        %v1697 = vpop.xlane.xlu0 %1696
        %v1698 = vsel %vm1655, %v1567, -inf
        %1699 = vmax.xlane.f32.xlu0 %v1698
        %v1700 = vpop.xlane.xlu0 %1699
        %v1701 = vsel %vm1655, %v1572, -inf
        %1702 = vmax.xlane.f32.xlu0 %v1701
        %v1703 = vpop.xlane.xlu0 %1702
        %v1704 = vsel %vm1655, %v1577, -inf
        %1705 = vmax.xlane.f32.xlu0 %v1704
        %v1706 = vpop.xlane.xlu0 %1705
        %v1707 = vsel %vm1655, %v1582, -inf
        %1708 = vmax.xlane.f32.xlu0 %v1707
        %v1709 = vpop.xlane.xlu0 %1708
        %v1710 = vsel %vm1655, %v1587, -inf
        %1711 = vmax.xlane.f32.xlu0 %v1710
        %v1712 = vpop.xlane.xlu0 %1711
        %v1713 = vsel %vm1655, %v1592, -inf
        %1714 = vmax.xlane.f32.xlu0 %v1713
        %v1715 = vpop.xlane.xlu0 %1714
        %v1716 = vsel %vm1655, %v1597, -inf
        %1717 = vmax.xlane.f32.xlu0 %v1716
        %v1718 = vpop.xlane.xlu0 %1717
        %v1719 = vsel %vm1655, %v1602, -inf
        %1720 = vmax.xlane.f32.xlu0 %v1719
        %v1721 = vpop.xlane.xlu0 %1720
        %v1722 = vsel %vm1655, %v1607, -inf
        %1723 = vmax.xlane.f32.xlu0 %v1722
        %v1724 = vpop.xlane.xlu0 %1723
        %v1725 = vsel %vm1655, %v1612, -inf
        %1726 = vmax.xlane.f32.xlu0 %v1725
        %v1727 = vpop.xlane.xlu0 %1726
        %v1728 = vsel %vm1655, %v1617, -inf
        %1729 = vmax.xlane.f32.xlu0 %v1728
        %v1730 = vpop.xlane.xlu0 %1729
        %v1731 = vsel %vm1655, %v1622, -inf
        %1732 = vmax.xlane.f32.xlu0 %v1731
        %v1733 = vpop.xlane.xlu0 %1732
        %v1734 = vsel %vm1655, %v1627, -inf
        %1735 = vmax.xlane.f32.xlu0 %v1734
        %v1736 = vpop.xlane.xlu0 %1735
        %v1737 = vsel %vm1655, %v1632, -inf
        %1738 = vmax.xlane.f32.xlu0 %v1737
        %v1739 = vpop.xlane.xlu0 %1738
        %v1740 = vsel %vm1655, %v1637, -inf
        %1741 = vmax.xlane.f32.xlu0 %v1740
        %v1742 = vpop.xlane.xlu0 %1741
        %v1743 = vsel %vm1655, %v1642, -inf
        %1744 = vmax.xlane.f32.xlu0 %v1743
        %v1745 = vpop.xlane.xlu0 %1744
        %v1746 = vsel %vm1655, %v1647, -inf
        %1747 = vmax.xlane.f32.xlu0 %v1746
        %v1748 = vpop.xlane.xlu0 %1747
        %v1749 = vsel %vm1655, %v1652, -inf
        %1750 = vmax.xlane.f32.xlu0 %v1749
        %v1751 = vpop.xlane.xlu0 %1750
        %v1752 = vsub.f32 %v1497, %v1658
        %v1753 = vsub.f32 %v1502, %v1661
        %v1754 = vsub.f32 %v1507, %v1664
        %v1755 = vsub.f32 %v1512, %v1667
        %v1756 = vsub.f32 %v1517, %v1670
        %v1757 = vsub.f32 %v1522, %v1673
        %v1758 = vsub.f32 %v1527, %v1676
        %v1759 = vsub.f32 %v1532, %v1679
        %v1760 = vsub.f32 %v1537, %v1682
        %v1761 = vsub.f32 %v1542, %v1685
        %v1762 = vsub.f32 %v1547, %v1688
        %v1763 = vsub.f32 %v1552, %v1691
        %v1764 = vsub.f32 %v1557, %v1694
        %v1765 = vsub.f32 %v1562, %v1697
        %v1766 = vsub.f32 %v1567, %v1700
        %v1767 = vsub.f32 %v1572, %v1703
        %v1768 = vsub.f32 %v1577, %v1706
        %v1769 = vsub.f32 %v1582, %v1709
        %v1770 = vsub.f32 %v1587, %v1712
        %v1771 = vsub.f32 %v1592, %v1715
        %v1772 = vsub.f32 %v1597, %v1718
        %v1773 = vsub.f32 %v1602, %v1721
        %v1774 = vsub.f32 %v1607, %v1724
        %v1775 = vsub.f32 %v1612, %v1727
        %v1776 = vsub.f32 %v1617, %v1730
        %v1777 = vsub.f32 %v1622, %v1733
        %v1778 = vsub.f32 %v1627, %v1736
        %v1779 = vsub.f32 %v1632, %v1739
        %v1780 = vsub.f32 %v1637, %v1742
        %v1781 = vsub.f32 %v1642, %v1745
        %v1782 = vsub.f32 %v1647, %v1748
        %v1783 = vsub.f32 %v1652, %v1751
        %v1784 = vmul.f32 %v1752, 1.442695
        %v1785 = vpow.pop %v1784
        %v1786 = vmul.f32 %v1753, 1.442695
        %v1787 = vpow.pop %v1786
        %v1788 = vmul.f32 %v1754, 1.442695
        %v1789 = vpow.pop %v1788
        %v1790 = vmul.f32 %v1755, 1.442695
        %v1791 = vpow.pop %v1790
        %v1792 = vmul.f32 %v1756, 1.442695
        %v1793 = vpow.pop %v1792
        %v1794 = vmul.f32 %v1757, 1.442695
        %v1795 = vpow.pop %v1794
        %v1796 = vmul.f32 %v1758, 1.442695
        %v1797 = vpow.pop %v1796
        %v1798 = vmul.f32 %v1759, 1.442695
        %v1799 = vpow.pop %v1798
        %v1800 = vmul.f32 %v1760, 1.442695
        %v1801 = vpow.pop %v1800
        %v1802 = vmul.f32 %v1761, 1.442695
        %v1803 = vpow.pop %v1802
        %v1804 = vmul.f32 %v1762, 1.442695
        %v1805 = vpow.pop %v1804
        %v1806 = vmul.f32 %v1763, 1.442695
        %v1807 = vpow.pop %v1806
        %v1808 = vmul.f32 %v1764, 1.442695
        %v1809 = vpow.pop %v1808
        %v1810 = vmul.f32 %v1765, 1.442695
        %v1811 = vpow.pop %v1810
        %v1812 = vmul.f32 %v1766, 1.442695
        %v1813 = vpow.pop %v1812
        %v1814 = vmul.f32 %v1767, 1.442695
        %v1815 = vpow.pop %v1814
        %v1816 = vmul.f32 %v1768, 1.442695
        %v1817 = vpow.pop %v1816
        %v1818 = vmul.f32 %v1769, 1.442695
        %v1819 = vpow.pop %v1818
        %v1820 = vmul.f32 %v1770, 1.442695
        %v1821 = vpow.pop %v1820
        %v1822 = vmul.f32 %v1771, 1.442695
        %v1823 = vpow.pop %v1822
        %v1824 = vmul.f32 %v1772, 1.442695
        %v1825 = vpow.pop %v1824
        %v1826 = vmul.f32 %v1773, 1.442695
        %v1827 = vpow.pop %v1826
        %v1828 = vmul.f32 %v1774, 1.442695
        %v1829 = vpow.pop %v1828
        %v1830 = vmul.f32 %v1775, 1.442695
        %v1831 = vpow.pop %v1830
        %v1832 = vmul.f32 %v1776, 1.442695
        %v1833 = vpow.pop %v1832
        %v1834 = vmul.f32 %v1777, 1.442695
        %v1835 = vpow.pop %v1834
        %v1836 = vmul.f32 %v1778, 1.442695
        %v1837 = vpow.pop %v1836
        %v1838 = vmul.f32 %v1779, 1.442695
        %v1839 = vpow.pop %v1838
        %v1840 = vmul.f32 %v1780, 1.442695
        %v1841 = vpow.pop %v1840
        %v1842 = vmul.f32 %v1781, 1.442695
        %v1843 = vpow.pop %v1842
        %v1844 = vmul.f32 %v1782, 1.442695
        %v1845 = vpow.pop %v1844
        %v1846 = vmul.f32 %v1783, 1.442695
        %v1847 = vpow.pop %v1846
        %v1848 = vsel %vm1655, %v1785, 0.0
        %1849 = vadd.xlane.f32.xlu0 %v1848
        %v1850 = vpop.xlane.xlu0 %1849
        %v1851 = vsel %vm1655, %v1787, 0.0
        %1852 = vadd.xlane.f32.xlu0 %v1851
        %v1853 = vpop.xlane.xlu0 %1852
        %v1854 = vsel %vm1655, %v1789, 0.0
        %1855 = vadd.xlane.f32.xlu0 %v1854
        %v1856 = vpop.xlane.xlu0 %1855
        %v1857 = vsel %vm1655, %v1791, 0.0
        %1858 = vadd.xlane.f32.xlu0 %v1857
        %v1859 = vpop.xlane.xlu0 %1858
        %v1860 = vsel %vm1655, %v1793, 0.0
        %1861 = vadd.xlane.f32.xlu0 %v1860
        %v1862 = vpop.xlane.xlu0 %1861
        %v1863 = vsel %vm1655, %v1795, 0.0
        %1864 = vadd.xlane.f32.xlu0 %v1863
        %v1865 = vpop.xlane.xlu0 %1864
        %v1866 = vsel %vm1655, %v1797, 0.0
        %1867 = vadd.xlane.f32.xlu0 %v1866
        %v1868 = vpop.xlane.xlu0 %1867
        %v1869 = vsel %vm1655, %v1799, 0.0
        %1870 = vadd.xlane.f32.xlu0 %v1869
        %v1871 = vpop.xlane.xlu0 %1870
        %v1872 = vsel %vm1655, %v1801, 0.0
        %1873 = vadd.xlane.f32.xlu0 %v1872
        %v1874 = vpop.xlane.xlu0 %1873
        %v1875 = vsel %vm1655, %v1803, 0.0
        %1876 = vadd.xlane.f32.xlu0 %v1875
        %v1877 = vpop.xlane.xlu0 %1876
        %v1878 = vsel %vm1655, %v1805, 0.0
        %1879 = vadd.xlane.f32.xlu0 %v1878
        %v1880 = vpop.xlane.xlu0 %1879
        %v1881 = vsel %vm1655, %v1807, 0.0
        %1882 = vadd.xlane.f32.xlu0 %v1881
        %v1883 = vpop.xlane.xlu0 %1882
        %v1884 = vsel %vm1655, %v1809, 0.0
        %1885 = vadd.xlane.f32.xlu0 %v1884
        %v1886 = vpop.xlane.xlu0 %1885
        %v1887 = vsel %vm1655, %v1811, 0.0
        %1888 = vadd.xlane.f32.xlu0 %v1887
        %v1889 = vpop.xlane.xlu0 %1888
        %v1890 = vsel %vm1655, %v1813, 0.0
        %1891 = vadd.xlane.f32.xlu0 %v1890
        %v1892 = vpop.xlane.xlu0 %1891
        %v1893 = vsel %vm1655, %v1815, 0.0
        %1894 = vadd.xlane.f32.xlu0 %v1893
        %v1895 = vpop.xlane.xlu0 %1894
        %v1896 = vsel %vm1655, %v1817, 0.0
        %1897 = vadd.xlane.f32.xlu0 %v1896
        %v1898 = vpop.xlane.xlu0 %1897
        %v1899 = vsel %vm1655, %v1819, 0.0
        %1900 = vadd.xlane.f32.xlu0 %v1899
        %v1901 = vpop.xlane.xlu0 %1900
        %v1902 = vsel %vm1655, %v1821, 0.0
        %1903 = vadd.xlane.f32.xlu0 %v1902
        %v1904 = vpop.xlane.xlu0 %1903
        %v1905 = vsel %vm1655, %v1823, 0.0
        %1906 = vadd.xlane.f32.xlu0 %v1905
        %v1907 = vpop.xlane.xlu0 %1906
        %v1908 = vsel %vm1655, %v1825, 0.0
        %1909 = vadd.xlane.f32.xlu0 %v1908
        %v1910 = vpop.xlane.xlu0 %1909
        %v1911 = vsel %vm1655, %v1827, 0.0
        %1912 = vadd.xlane.f32.xlu0 %v1911
        %v1913 = vpop.xlane.xlu0 %1912
        %v1914 = vsel %vm1655, %v1829, 0.0
        %1915 = vadd.xlane.f32.xlu0 %v1914
        %v1916 = vpop.xlane.xlu0 %1915
        %v1917 = vsel %vm1655, %v1831, 0.0
        %1918 = vadd.xlane.f32.xlu0 %v1917
        %v1919 = vpop.xlane.xlu0 %1918
        %v1920 = vsel %vm1655, %v1833, 0.0
        %1921 = vadd.xlane.f32.xlu0 %v1920
        %v1922 = vpop.xlane.xlu0 %1921
        %v1923 = vsel %vm1655, %v1835, 0.0
        %1924 = vadd.xlane.f32.xlu0 %v1923
        %v1925 = vpop.xlane.xlu0 %1924
        %v1926 = vsel %vm1655, %v1837, 0.0
        %1927 = vadd.xlane.f32.xlu0 %v1926
        %v1928 = vpop.xlane.xlu0 %1927
        %v1929 = vsel %vm1655, %v1839, 0.0
        %1930 = vadd.xlane.f32.xlu0 %v1929
        %v1931 = vpop.xlane.xlu0 %1930
        %v1932 = vsel %vm1655, %v1841, 0.0
        %1933 = vadd.xlane.f32.xlu0 %v1932
        %v1934 = vpop.xlane.xlu0 %1933
        %v1935 = vsel %vm1655, %v1843, 0.0
        %1936 = vadd.xlane.f32.xlu0 %v1935
        %v1937 = vpop.xlane.xlu0 %1936
        %v1938 = vsel %vm1655, %v1845, 0.0
        %1939 = vadd.xlane.f32.xlu0 %v1938
        %v1940 = vpop.xlane.xlu0 %1939
        %v1941 = vsel %vm1655, %v1847, 0.0
        %1942 = vadd.xlane.f32.xlu0 %v1941
        %v1943 = vpop.xlane.xlu0 %1942
        %v1944 = vld [vmem:[#allocation3] sm:$0xff]
        %v1945 = vld [vmem:[#allocation3 + $0x8] sm:$0xff]
        %v1946 = vld [vmem:[#allocation3 + $0x10] sm:$0xff]
        %v1947 = vld [vmem:[#allocation3 + $0x18] sm:$0xff]
        %v1948 = vld [vmem:[#allocation3 + $0x20] sm:$0xff]
        %v1949 = vld [vmem:[#allocation3 + $0x28] sm:$0xff]
        %v1950 = vld [vmem:[#allocation3 + $0x30] sm:$0xff]
        %v1951 = vld [vmem:[#allocation3 + $0x38] sm:$0xff]
        %v1953 = vsel %vm1655, %v1785, 0
        %v1956 = vsel %vm1655, %v1787, 0
        %v1959 = vsel %vm1655, %v1789, 0
        %v1962 = vsel %vm1655, %v1791, 0
        %v1965 = vsel %vm1655, %v1793, 0
        %v1968 = vsel %vm1655, %v1795, 0
        %v1971 = vsel %vm1655, %v1797, 0
        %v1974 = vsel %vm1655, %v1799, 0
        %v1977 = vsel %vm1655, %v1801, 0
        %v1980 = vsel %vm1655, %v1803, 0
        %v1983 = vsel %vm1655, %v1805, 0
        %v1986 = vsel %vm1655, %v1807, 0
        %v1989 = vsel %vm1655, %v1809, 0
        %v1992 = vsel %vm1655, %v1811, 0
        %v1995 = vsel %vm1655, %v1813, 0
        %v1998 = vsel %vm1655, %v1815, 0
        %v2001 = vsel %vm1655, %v1817, 0
        %v2004 = vsel %vm1655, %v1819, 0
        %v2007 = vsel %vm1655, %v1821, 0
        %v2010 = vsel %vm1655, %v1823, 0
        %v2013 = vsel %vm1655, %v1825, 0
        %v2016 = vsel %vm1655, %v1827, 0
        %v2019 = vsel %vm1655, %v1829, 0
        %v2022 = vsel %vm1655, %v1831, 0
        %v2025 = vsel %vm1655, %v1833, 0
        %v2028 = vsel %vm1655, %v1835, 0
        %v2031 = vsel %vm1655, %v1837, 0
        %v2034 = vsel %vm1655, %v1839, 0
        %v2037 = vsel %vm1655, %v1841, 0
        %v2040 = vsel %vm1655, %v1843, 0
        %v2043 = vsel %vm1655, %v1845, 0
        %v2046 = vsel %vm1655, %v1847, 0
        %2048 = vmatprep.subr.mxu0 0.0
        %2049 = vmatpush1.msra.mxu0 %v1944
        %2050 = vmatprep.subr.mxu0 0.0
        %2051 = vmatpush1.msra.mxu0 %v1945
        %2052 = vmatprep.subr.mxu0 0.0
        %2053 = vmatpush1.msra.mxu0 %v1946
        %2054 = vmatprep.subr.mxu0 0.0
        %2055 = vmatpush1.msra.mxu0 %v1947
        %2056 = vmatprep.subr.mxu0 0.0
        %2057 = vmatpush1.msra.mxu0 %v1948
        %2058 = vmatprep.subr.mxu0 0.0
        %2059 = vmatpush1.msra.mxu0 %v1949
        %2060 = vmatprep.subr.mxu0 0.0
        %2061 = vmatpush1.msra.mxu0 %v1950
        %2062 = vmatprep.subr.mxu0 0.0
        %2063 = vmatpush1.msra.mxu0 %v1951
        %2064 = vmatprep.subr.mxu0 0.0
        %2065 = vmatpush1.msra.mxu0 0.0
        %2066 = vmatprep.subr.mxu0 0.0
        %2067 = vmatpush1.msra.mxu0 0.0
        %2068 = vmatprep.subr.mxu0 0.0
        %2069 = vmatpush1.msra.mxu0 0.0
        %2070 = vmatprep.subr.mxu0 0.0
        %2071 = vmatpush1.msra.mxu0 0.0
        %2072 = vmatprep.subr.mxu0 0.0
        %2073 = vmatpush1.msra.mxu0 0.0
        %2074 = vmatprep.subr.mxu0 0.0
        %2075 = vmatpush1.msra.mxu0 0.0
        %2076 = vmatprep.subr.mxu0 0.0
        %2077 = vmatpush1.msra.mxu0 0.0
        %2078 = vmatprep.subr.mxu0 0.0
        %2079 = vmatpush1.msra.mxu0 0.0
        %2080 = vmatprep.subr.mxu0 0.0
        %2081 = vmatpush1.msra.mxu0 0.0
        %2082 = vmatprep.subr.mxu0 0.0
        %2083 = vmatpush1.msra.mxu0 0.0
        %2084 = vmatprep.subr.mxu0 0.0
        %2085 = vmatpush1.msra.mxu0 0.0
        %2086 = vmatprep.subr.mxu0 0.0
        %2087 = vmatpush1.msra.mxu0 0.0
        %2088 = vmatprep.subr.mxu0 0.0
        %2089 = vmatpush1.msra.mxu0 0.0
        %2090 = vmatprep.subr.mxu0 0.0
        %2091 = vmatpush1.msra.mxu0 0.0
        %2092 = vmatprep.subr.mxu0 0.0
        %2093 = vmatpush1.msra.mxu0 0.0
        %2094 = vmatprep.subr.mxu0 0.0
        %2095 = vmatpush1.msra.mxu0 0.0
        %2096 = vmatprep.subr.mxu0 0.0
        %2097 = vmatpush1.msra.mxu0 0.0
        %2098 = vmatprep.subr.mxu0 0.0
        %2099 = vmatpush1.msra.mxu0 0.0
        %2100 = vmatprep.subr.mxu0 0.0
        %2101 = vmatpush1.msra.mxu0 0.0
        %2102 = vmatprep.subr.mxu0 0.0
        %2103 = vmatpush1.msra.mxu0 0.0
        %2104 = vmatprep.subr.mxu0 0.0
        %2105 = vmatpush1.msra.mxu0 0.0
        %2106 = vmatprep.subr.mxu0 0.0
        %2107 = vmatpush1.msra.mxu0 0.0
        %2108 = vmatprep.subr.mxu0 0.0
        %2109 = vmatpush1.msra.mxu0 0.0
        %2110 = vmatprep.subr.mxu0 0.0
        %2111 = vmatpush1.msra.mxu0 0.0
        %2112 = vmatprep.mubr.f32.mxu0 0.0
        %2113 = vmatmul.mubr.f32.gmra.mrb[0].mxu0 %v1953
        %v2114 = vpop.f32.mrb[0].mxu0
        %v2115 = vadd.f32 0.0, %v2114
        %v2116 = vpop.f32.mrb[0].mxu0
        %2117 = vmatprep.mubr.f32.mxu0 0.0
        %2118 = vmatmul.mubr.f32.gmra.mrb[0].mxu0 %v1956
        %v2119 = vpop.f32.mrb[0].mxu0
        %v2120 = vadd.f32 0.0, %v2119
        %v2121 = vpop.f32.mrb[0].mxu0
        %2122 = vmatprep.mubr.f32.mxu0 0.0
        %2123 = vmatmul.mubr.f32.gmra.mrb[0].mxu0 %v1959
        %v2124 = vpop.f32.mrb[0].mxu0
        %v2125 = vadd.f32 0.0, %v2124
        %v2126 = vpop.f32.mrb[0].mxu0
        %2127 = vmatprep.mubr.f32.mxu0 0.0
        %2128 = vmatmul.mubr.f32.gmra.mrb[0].mxu0 %v1962
        %v2129 = vpop.f32.mrb[0].mxu0
        %v2130 = vadd.f32 0.0, %v2129
        %v2131 = vpop.f32.mrb[0].mxu0
        %2132 = vmatprep.mubr.f32.mxu0 0.0
        %2133 = vmatmul.mubr.f32.gmra.mrb[0].mxu0 %v1965
        %v2134 = vpop.f32.mrb[0].mxu0
        %v2135 = vadd.f32 0.0, %v2134
        %v2136 = vpop.f32.mrb[0].mxu0
        %2137 = vmatprep.mubr.f32.mxu0 0.0
        %2138 = vmatmul.mubr.f32.gmra.mrb[0].mxu0 %v1968
        %v2139 = vpop.f32.mrb[0].mxu0
        %v2140 = vadd.f32 0.0, %v2139
        %v2141 = vpop.f32.mrb[0].mxu0
        %2142 = vmatprep.mubr.f32.mxu0 0.0
        %2143 = vmatmul.mubr.f32.gmra.mrb[0].mxu0 %v1971
        %v2144 = vpop.f32.mrb[0].mxu0
        %v2145 = vadd.f32 0.0, %v2144
        %v2146 = vpop.f32.mrb[0].mxu0
        %2147 = vmatprep.mubr.f32.mxu0 0.0
        %2148 = vmatmul.mubr.f32.gmra.mrb[0].mxu0 %v1974
        %v2149 = vpop.f32.mrb[0].mxu0
        %v2150 = vadd.f32 0.0, %v2149
        %v2151 = vpop.f32.mrb[0].mxu0
        %2152 = vmatprep.mubr.f32.mxu0 0.0
        %2153 = vmatmul.mubr.f32.gmra.mrb[0].mxu0 %v1977
        %v2154 = vpop.f32.mrb[0].mxu0
        %v2155 = vadd.f32 0.0, %v2154
        %v2156 = vpop.f32.mrb[0].mxu0
        %2157 = vmatprep.mubr.f32.mxu0 0.0
        %2158 = vmatmul.mubr.f32.gmra.mrb[0].mxu0 %v1980
        %v2159 = vpop.f32.mrb[0].mxu0
        %v2160 = vadd.f32 0.0, %v2159
        %v2161 = vpop.f32.mrb[0].mxu0
        %2162 = vmatprep.mubr.f32.mxu0 0.0
        %2163 = vmatmul.mubr.f32.gmra.mrb[0].mxu0 %v1983
        %v2164 = vpop.f32.mrb[0].mxu0
        %v2165 = vadd.f32 0.0, %v2164
        %v2166 = vpop.f32.mrb[0].mxu0
        %2167 = vmatprep.mubr.f32.mxu0 0.0
        %2168 = vmatmul.mubr.f32.gmra.mrb[0].mxu0 %v1986
        %v2169 = vpop.f32.mrb[0].mxu0
        %v2170 = vadd.f32 0.0, %v2169
        %v2171 = vpop.f32.mrb[0].mxu0
        %2172 = vmatprep.mubr.f32.mxu0 0.0
        %2173 = vmatmul.mubr.f32.gmra.mrb[0].mxu0 %v1989
        %v2174 = vpop.f32.mrb[0].mxu0
        %v2175 = vadd.f32 0.0, %v2174
        %v2176 = vpop.f32.mrb[0].mxu0
        %2177 = vmatprep.mubr.f32.mxu0 0.0
        %2178 = vmatmul.mubr.f32.gmra.mrb[0].mxu0 %v1992
        %v2179 = vpop.f32.mrb[0].mxu0
        %v2180 = vadd.f32 0.0, %v2179
        %v2181 = vpop.f32.mrb[0].mxu0
        %2182 = vmatprep.mubr.f32.mxu0 0.0
        %2183 = vmatmul.mubr.f32.gmra.mrb[0].mxu0 %v1995
        %v2184 = vpop.f32.mrb[0].mxu0
        %v2185 = vadd.f32 0.0, %v2184
        %v2186 = vpop.f32.mrb[0].mxu0
        %2187 = vmatprep.mubr.f32.mxu0 0.0
        %2188 = vmatmul.mubr.f32.gmra.mrb[0].mxu0 %v1998
        %v2189 = vpop.f32.mrb[0].mxu0
        %v2190 = vadd.f32 0.0, %v2189
        %v2191 = vpop.f32.mrb[0].mxu0
        %2192 = vmatprep.mubr.f32.mxu0 0.0
        %2193 = vmatmul.mubr.f32.gmra.mrb[0].mxu0 %v2001
        %v2194 = vpop.f32.mrb[0].mxu0
        %v2195 = vadd.f32 0.0, %v2194
        %v2196 = vpop.f32.mrb[0].mxu0
        %2197 = vmatprep.mubr.f32.mxu0 0.0
        %2198 = vmatmul.mubr.f32.gmra.mrb[0].mxu0 %v2004
        %v2199 = vpop.f32.mrb[0].mxu0
        %v2200 = vadd.f32 0.0, %v2199
        %v2201 = vpop.f32.mrb[0].mxu0
        %2202 = vmatprep.mubr.f32.mxu0 0.0
        %2203 = vmatmul.mubr.f32.gmra.mrb[0].mxu0 %v2007
        %v2204 = vpop.f32.mrb[0].mxu0
        %v2205 = vadd.f32 0.0, %v2204
        %v2206 = vpop.f32.mrb[0].mxu0
        %2207 = vmatprep.mubr.f32.mxu0 0.0
        %2208 = vmatmul.mubr.f32.gmra.mrb[0].mxu0 %v2010
        %v2209 = vpop.f32.mrb[0].mxu0
        %v2210 = vadd.f32 0.0, %v2209
        %v2211 = vpop.f32.mrb[0].mxu0
        %2212 = vmatprep.mubr.f32.mxu0 0.0
        %2213 = vmatmul.mubr.f32.gmra.mrb[0].mxu0 %v2013
        %v2214 = vpop.f32.mrb[0].mxu0
        %v2215 = vadd.f32 0.0, %v2214
        %v2216 = vpop.f32.mrb[0].mxu0
        %2217 = vmatprep.mubr.f32.mxu0 0.0
        %2218 = vmatmul.mubr.f32.gmra.mrb[0].mxu0 %v2016
        %v2219 = vpop.f32.mrb[0].mxu0
        %v2220 = vadd.f32 0.0, %v2219
        %v2221 = vpop.f32.mrb[0].mxu0
        %2222 = vmatprep.mubr.f32.mxu0 0.0
        %2223 = vmatmul.mubr.f32.gmra.mrb[0].mxu0 %v2019
        %v2224 = vpop.f32.mrb[0].mxu0
        %v2225 = vadd.f32 0.0, %v2224
        %v2226 = vpop.f32.mrb[0].mxu0
        %2227 = vmatprep.mubr.f32.mxu0 0.0
        %2228 = vmatmul.mubr.f32.gmra.mrb[0].mxu0 %v2022
        %v2229 = vpop.f32.mrb[0].mxu0
        %v2230 = vadd.f32 0.0, %v2229
        %v2231 = vpop.f32.mrb[0].mxu0
        %2232 = vmatprep.mubr.f32.mxu0 0.0
        %2233 = vmatmul.mubr.f32.gmra.mrb[0].mxu0 %v2025
        %v2234 = vpop.f32.mrb[0].mxu0
        %v2235 = vadd.f32 0.0, %v2234
        %v2236 = vpop.f32.mrb[0].mxu0
        %2237 = vmatprep.mubr.f32.mxu0 0.0
        %2238 = vmatmul.mubr.f32.gmra.mrb[0].mxu0 %v2028
        %v2239 = vpop.f32.mrb[0].mxu0
        %v2240 = vadd.f32 0.0, %v2239
        %v2241 = vpop.f32.mrb[0].mxu0
        %2242 = vmatprep.mubr.f32.mxu0 0.0
        %2243 = vmatmul.mubr.f32.gmra.mrb[0].mxu0 %v2031
        %v2244 = vpop.f32.mrb[0].mxu0
        %v2245 = vadd.f32 0.0, %v2244
        %v2246 = vpop.f32.mrb[0].mxu0
        %2247 = vmatprep.mubr.f32.mxu0 0.0
        %2248 = vmatmul.mubr.f32.gmra.mrb[0].mxu0 %v2034
        %v2249 = vpop.f32.mrb[0].mxu0
        %v2250 = vadd.f32 0.0, %v2249
        %v2251 = vpop.f32.mrb[0].mxu0
        %2252 = vmatprep.mubr.f32.mxu0 0.0
        %2253 = vmatmul.mubr.f32.gmra.mrb[0].mxu0 %v2037
        %v2254 = vpop.f32.mrb[0].mxu0
        %v2255 = vadd.f32 0.0, %v2254
        %v2256 = vpop.f32.mrb[0].mxu0
        %2257 = vmatprep.mubr.f32.mxu0 0.0
        %2258 = vmatmul.mubr.f32.gmra.mrb[0].mxu0 %v2040
        %v2259 = vpop.f32.mrb[0].mxu0
        %v2260 = vadd.f32 0.0, %v2259
        %v2261 = vpop.f32.mrb[0].mxu0
        %2262 = vmatprep.mubr.f32.mxu0 0.0
        %2263 = vmatmul.mubr.f32.gmra.mrb[0].mxu0 %v2043
        %v2264 = vpop.f32.mrb[0].mxu0
        %v2265 = vadd.f32 0.0, %v2264
        %v2266 = vpop.f32.mrb[0].mxu0
        %2267 = vmatprep.mubr.f32.mxu0 0.0
        %2268 = vmatmul.mubr.f32.gmra.mrb[0].mxu0 %v2046
        %v2269 = vpop.f32.mrb[0].mxu0
        %v2270 = vadd.f32 0.0, %v2269
        %v2271 = vpop.f32.mrb[0].mxu0
        %2272 = vdwg.mxu0
        %v2273 = vrcp.pop %v1850
        %v2274 = vrcp.pop %v1853
        %v2275 = vrcp.pop %v1856
        %v2276 = vrcp.pop %v1859
        %v2277 = vrcp.pop %v1862
        %v2278 = vrcp.pop %v1865
        %v2279 = vrcp.pop %v1868
        %v2280 = vrcp.pop %v1871
        %v2281 = vrcp.pop %v1874
        %v2282 = vrcp.pop %v1877
        %v2283 = vrcp.pop %v1880
        %v2284 = vrcp.pop %v1883
        %v2285 = vrcp.pop %v1886
        %v2286 = vrcp.pop %v1889
        %v2287 = vrcp.pop %v1892
        %v2288 = vrcp.pop %v1895
        %v2289 = vrcp.pop %v1898
        %v2290 = vrcp.pop %v1901
        %v2291 = vrcp.pop %v1904
        %v2292 = vrcp.pop %v1907
        %v2293 = vrcp.pop %v1910
        %v2294 = vrcp.pop %v1913
        %v2295 = vrcp.pop %v1916
        %v2296 = vrcp.pop %v1919
        %v2297 = vrcp.pop %v1922
        %v2298 = vrcp.pop %v1925
        %v2299 = vrcp.pop %v1928
        %v2300 = vrcp.pop %v1931
        %v2301 = vrcp.pop %v1934
        %v2302 = vrcp.pop %v1937
        %v2303 = vrcp.pop %v1940
        %v2304 = vrcp.pop %v1943
        %v2305 = vmul.f32 %v2115, %v2273
        %v2306 = vmul.f32 %v2120, %v2274
        %v2307 = vmul.f32 %v2125, %v2275
        %v2308 = vmul.f32 %v2130, %v2276
        %v2309 = vmul.f32 %v2135, %v2277
        %v2310 = vmul.f32 %v2140, %v2278
        %v2311 = vmul.f32 %v2145, %v2279
        %v2312 = vmul.f32 %v2150, %v2280
        %v2313 = vmul.f32 %v2155, %v2281
        %v2314 = vmul.f32 %v2160, %v2282
        %v2315 = vmul.f32 %v2165, %v2283
        %v2316 = vmul.f32 %v2170, %v2284
        %v2317 = vmul.f32 %v2175, %v2285
        %v2318 = vmul.f32 %v2180, %v2286
        %v2319 = vmul.f32 %v2185, %v2287
        %v2320 = vmul.f32 %v2190, %v2288
        %v2321 = vmul.f32 %v2195, %v2289
        %v2322 = vmul.f32 %v2200, %v2290
        %v2323 = vmul.f32 %v2205, %v2291
        %v2324 = vmul.f32 %v2210, %v2292
        %v2325 = vmul.f32 %v2215, %v2293
        %v2326 = vmul.f32 %v2220, %v2294
        %v2327 = vmul.f32 %v2225, %v2295
        %v2328 = vmul.f32 %v2230, %v2296
        %v2329 = vmul.f32 %v2235, %v2297
        %v2330 = vmul.f32 %v2240, %v2298
        %v2331 = vmul.f32 %v2245, %v2299
        %v2332 = vmul.f32 %v2250, %v2300
        %v2333 = vmul.f32 %v2255, %v2301
        %v2334 = vmul.f32 %v2260, %v2302
        %v2335 = vmul.f32 %v2265, %v2303
        %v2336 = vmul.f32 %v2270, %v2304
        %v2337 = vld [vmem:[%s4] sm:$0xff]
        %v2338 = vld [vmem:[%s4 + $0x8] sm:$0xff]
        %v2339 = vld [vmem:[%s4 + $0x10] sm:$0xff]
        %v2340 = vld [vmem:[%s4 + $0x18] sm:$0xff]
        %vm2341 = vcmask 261120
        %v2343 = vsel %vm2341, %v2305, 0
        %v2346 = vsel %vm2341, %v2306, 0
        %v2349 = vsel %vm2341, %v2307, 0
        %v2352 = vsel %vm2341, %v2308, 0
        %v2355 = vsel %vm2341, %v2309, 0
        %v2358 = vsel %vm2341, %v2310, 0
        %v2361 = vsel %vm2341, %v2311, 0
        %v2364 = vsel %vm2341, %v2312, 0
        %v2367 = vsel %vm2341, %v2313, 0
        %v2370 = vsel %vm2341, %v2314, 0
        %v2373 = vsel %vm2341, %v2315, 0
        %v2376 = vsel %vm2341, %v2316, 0
        %v2379 = vsel %vm2341, %v2317, 0
        %v2382 = vsel %vm2341, %v2318, 0
        %v2385 = vsel %vm2341, %v2319, 0
        %v2388 = vsel %vm2341, %v2320, 0
        %v2391 = vsel %vm2341, %v2321, 0
        %v2394 = vsel %vm2341, %v2322, 0
        %v2397 = vsel %vm2341, %v2323, 0
        %v2400 = vsel %vm2341, %v2324, 0
        %v2403 = vsel %vm2341, %v2325, 0
        %v2406 = vsel %vm2341, %v2326, 0
        %v2409 = vsel %vm2341, %v2327, 0
        %v2412 = vsel %vm2341, %v2328, 0
        %v2415 = vsel %vm2341, %v2329, 0
        %v2418 = vsel %vm2341, %v2330, 0
        %v2421 = vsel %vm2341, %v2331, 0
        %v2424 = vsel %vm2341, %v2332, 0
        %v2427 = vsel %vm2341, %v2333, 0
        %v2430 = vsel %vm2341, %v2334, 0
        %v2433 = vsel %vm2341, %v2335, 0
        %v2436 = vsel %vm2341, %v2336, 0
        %2438 = vmatprep.subr.mxu0 0.0
        %2439 = vmatpush1.msra.mxu0 %v2337
        %2440 = vmatprep.subr.mxu0 0.0
        %2441 = vmatpush1.msra.mxu0 %v2338
        %2442 = vmatprep.subr.mxu0 0.0
        %2443 = vmatpush1.msra.mxu0 %v2339
        %2444 = vmatprep.subr.mxu0 0.0
        %2445 = vmatpush1.msra.mxu0 %v2340
        %2446 = vmatprep.subr.mxu0 0.0
        %2447 = vmatpush1.msra.mxu0 0.0
        %2448 = vmatprep.subr.mxu0 0.0
        %2449 = vmatpush1.msra.mxu0 0.0
        %2450 = vmatprep.subr.mxu0 0.0
        %2451 = vmatpush1.msra.mxu0 0.0
        %2452 = vmatprep.subr.mxu0 0.0
        %2453 = vmatpush1.msra.mxu0 0.0
        %2454 = vmatprep.subr.mxu0 0.0
        %2455 = vmatpush1.msra.mxu0 0.0
        %2456 = vmatprep.subr.mxu0 0.0
        %2457 = vmatpush1.msra.mxu0 0.0
        %2458 = vmatprep.subr.mxu0 0.0
        %2459 = vmatpush1.msra.mxu0 0.0
        %2460 = vmatprep.subr.mxu0 0.0
        %2461 = vmatpush1.msra.mxu0 0.0
        %2462 = vmatprep.subr.mxu0 0.0
        %2463 = vmatpush1.msra.mxu0 0.0
        %2464 = vmatprep.subr.mxu0 0.0
        %2465 = vmatpush1.msra.mxu0 0.0
        %2466 = vmatprep.subr.mxu0 0.0
        %2467 = vmatpush1.msra.mxu0 0.0
        %2468 = vmatprep.subr.mxu0 0.0
        %2469 = vmatpush1.msra.mxu0 0.0
        %2470 = vmatprep.subr.mxu0 0.0
        %2471 = vmatpush1.msra.mxu0 0.0
        %2472 = vmatprep.subr.mxu0 0.0
        %2473 = vmatpush1.msra.mxu0 0.0
        %2474 = vmatprep.subr.mxu0 0.0
        %2475 = vmatpush1.msra.mxu0 0.0
        %2476 = vmatprep.subr.mxu0 0.0
        %2477 = vmatpush1.msra.mxu0 0.0
        %2478 = vmatprep.subr.mxu0 0.0
        %2479 = vmatpush1.msra.mxu0 0.0
        %2480 = vmatprep.subr.mxu0 0.0
        %2481 = vmatpush1.msra.mxu0 0.0
        %2482 = vmatprep.subr.mxu0 0.0
        %2483 = vmatpush1.msra.mxu0 0.0
        %2484 = vmatprep.subr.mxu0 0.0
        %2485 = vmatpush1.msra.mxu0 0.0
        %2486 = vmatprep.subr.mxu0 0.0
        %2487 = vmatpush1.msra.mxu0 0.0
        %2488 = vmatprep.subr.mxu0 0.0
        %2489 = vmatpush1.msra.mxu0 0.0
        %2490 = vmatprep.subr.mxu0 0.0
        %2491 = vmatpush1.msra.mxu0 0.0
        %2492 = vmatprep.subr.mxu0 0.0
        %2493 = vmatpush1.msra.mxu0 0.0
        %2494 = vmatprep.subr.mxu0 0.0
        %2495 = vmatpush1.msra.mxu0 0.0
        %2496 = vmatprep.subr.mxu0 0.0
        %2497 = vmatpush1.msra.mxu0 0.0
        %2498 = vmatprep.subr.mxu0 0.0
        %2499 = vmatpush1.msra.mxu0 0.0
        %2500 = vmatprep.subr.mxu0 0.0
        %2501 = vmatpush1.msra.mxu0 0.0
        %2502 = vmatprep.mubr.f32.mxu0 0.0
        %2503 = vmatmul.mubr.f32.gmra.mrb[0].mxu0 %v2343
        %v2504 = vpop.f32.mrb[0].mxu0
        %v2505 = vadd.f32 %v1059, %v2504
        %v2506 = vpop.f32.mrb[0].mxu0
        %2507 = vmatprep.mubr.f32.mxu0 0.0
        %2508 = vmatmul.mubr.f32.gmra.mrb[0].mxu0 %v2346
        %v2509 = vpop.f32.mrb[0].mxu0
        %v2510 = vadd.f32 %v1060, %v2509
        %v2511 = vpop.f32.mrb[0].mxu0
        %2512 = vmatprep.mubr.f32.mxu0 0.0
        %2513 = vmatmul.mubr.f32.gmra.mrb[0].mxu0 %v2349
        %v2514 = vpop.f32.mrb[0].mxu0
        %v2515 = vadd.f32 %v1061, %v2514
        %v2516 = vpop.f32.mrb[0].mxu0
        %2517 = vmatprep.mubr.f32.mxu0 0.0
        %2518 = vmatmul.mubr.f32.gmra.mrb[0].mxu0 %v2352
        %v2519 = vpop.f32.mrb[0].mxu0
        %v2520 = vadd.f32 %v1062, %v2519
        %v2521 = vpop.f32.mrb[0].mxu0
        %2522 = vmatprep.mubr.f32.mxu0 0.0
        %2523 = vmatmul.mubr.f32.gmra.mrb[0].mxu0 %v2355
        %v2524 = vpop.f32.mrb[0].mxu0
        %v2525 = vadd.f32 %v1063, %v2524
        %v2526 = vpop.f32.mrb[0].mxu0
        %2527 = vmatprep.mubr.f32.mxu0 0.0
        %2528 = vmatmul.mubr.f32.gmra.mrb[0].mxu0 %v2358
        %v2529 = vpop.f32.mrb[0].mxu0
        %v2530 = vadd.f32 %v1064, %v2529
        %v2531 = vpop.f32.mrb[0].mxu0
        %2532 = vmatprep.mubr.f32.mxu0 0.0
        %2533 = vmatmul.mubr.f32.gmra.mrb[0].mxu0 %v2361
        %v2534 = vpop.f32.mrb[0].mxu0
        %v2535 = vadd.f32 %v1065, %v2534
        %v2536 = vpop.f32.mrb[0].mxu0
        %2537 = vmatprep.mubr.f32.mxu0 0.0
        %2538 = vmatmul.mubr.f32.gmra.mrb[0].mxu0 %v2364
        %v2539 = vpop.f32.mrb[0].mxu0
        %v2540 = vadd.f32 %v1066, %v2539
        %v2541 = vpop.f32.mrb[0].mxu0
        %2542 = vmatprep.mubr.f32.mxu0 0.0
        %2543 = vmatmul.mubr.f32.gmra.mrb[0].mxu0 %v2367
        %v2544 = vpop.f32.mrb[0].mxu0
        %v2545 = vadd.f32 %v1067, %v2544
        %v2546 = vpop.f32.mrb[0].mxu0
        %2547 = vmatprep.mubr.f32.mxu0 0.0
        %2548 = vmatmul.mubr.f32.gmra.mrb[0].mxu0 %v2370
        %v2549 = vpop.f32.mrb[0].mxu0
        %v2550 = vadd.f32 %v1068, %v2549
        %v2551 = vpop.f32.mrb[0].mxu0
        %2552 = vmatprep.mubr.f32.mxu0 0.0
        %2553 = vmatmul.mubr.f32.gmra.mrb[0].mxu0 %v2373
        %v2554 = vpop.f32.mrb[0].mxu0
        %v2555 = vadd.f32 %v1069, %v2554
        %v2556 = vpop.f32.mrb[0].mxu0
        %2557 = vmatprep.mubr.f32.mxu0 0.0
        %2558 = vmatmul.mubr.f32.gmra.mrb[0].mxu0 %v2376
        %v2559 = vpop.f32.mrb[0].mxu0
        %v2560 = vadd.f32 %v1070, %v2559
        %v2561 = vpop.f32.mrb[0].mxu0
        %2562 = vmatprep.mubr.f32.mxu0 0.0
        %2563 = vmatmul.mubr.f32.gmra.mrb[0].mxu0 %v2379
        %v2564 = vpop.f32.mrb[0].mxu0
        %v2565 = vadd.f32 %v1071, %v2564
        %v2566 = vpop.f32.mrb[0].mxu0
        %2567 = vmatprep.mubr.f32.mxu0 0.0
        %2568 = vmatmul.mubr.f32.gmra.mrb[0].mxu0 %v2382
        %v2569 = vpop.f32.mrb[0].mxu0
        %v2570 = vadd.f32 %v1072, %v2569
        %v2571 = vpop.f32.mrb[0].mxu0
        %2572 = vmatprep.mubr.f32.mxu0 0.0
        %2573 = vmatmul.mubr.f32.gmra.mrb[0].mxu0 %v2385
        %v2574 = vpop.f32.mrb[0].mxu0
        %v2575 = vadd.f32 %v1073, %v2574
        %v2576 = vpop.f32.mrb[0].mxu0
        %2577 = vmatprep.mubr.f32.mxu0 0.0
        %2578 = vmatmul.mubr.f32.gmra.mrb[0].mxu0 %v2388
        %v2579 = vpop.f32.mrb[0].mxu0
        %v2580 = vadd.f32 %v1074, %v2579
        %v2581 = vpop.f32.mrb[0].mxu0
        %2582 = vmatprep.mubr.f32.mxu0 0.0
        %2583 = vmatmul.mubr.f32.gmra.mrb[0].mxu0 %v2391
        %v2584 = vpop.f32.mrb[0].mxu0
        %v2585 = vadd.f32 %v1075, %v2584
        %v2586 = vpop.f32.mrb[0].mxu0
        %2587 = vmatprep.mubr.f32.mxu0 0.0
        %2588 = vmatmul.mubr.f32.gmra.mrb[0].mxu0 %v2394
        %v2589 = vpop.f32.mrb[0].mxu0
        %v2590 = vadd.f32 %v1076, %v2589
        %v2591 = vpop.f32.mrb[0].mxu0
        %2592 = vmatprep.mubr.f32.mxu0 0.0
        %2593 = vmatmul.mubr.f32.gmra.mrb[0].mxu0 %v2397
        %v2594 = vpop.f32.mrb[0].mxu0
        %v2595 = vadd.f32 %v1077, %v2594
        %v2596 = vpop.f32.mrb[0].mxu0
        %2597 = vmatprep.mubr.f32.mxu0 0.0
        %2598 = vmatmul.mubr.f32.gmra.mrb[0].mxu0 %v2400
        %v2599 = vpop.f32.mrb[0].mxu0
        %v2600 = vadd.f32 %v1078, %v2599
        %v2601 = vpop.f32.mrb[0].mxu0
        %2602 = vmatprep.mubr.f32.mxu0 0.0
        %2603 = vmatmul.mubr.f32.gmra.mrb[0].mxu0 %v2403
        %v2604 = vpop.f32.mrb[0].mxu0
        %v2605 = vadd.f32 %v1079, %v2604
        %v2606 = vpop.f32.mrb[0].mxu0
        %2607 = vmatprep.mubr.f32.mxu0 0.0
        %2608 = vmatmul.mubr.f32.gmra.mrb[0].mxu0 %v2406
        %v2609 = vpop.f32.mrb[0].mxu0
        %v2610 = vadd.f32 %v1080, %v2609
        %v2611 = vpop.f32.mrb[0].mxu0
        %2612 = vmatprep.mubr.f32.mxu0 0.0
        %2613 = vmatmul.mubr.f32.gmra.mrb[0].mxu0 %v2409
        %v2614 = vpop.f32.mrb[0].mxu0
        %v2615 = vadd.f32 %v1081, %v2614
        %v2616 = vpop.f32.mrb[0].mxu0
        %2617 = vmatprep.mubr.f32.mxu0 0.0
        %2618 = vmatmul.mubr.f32.gmra.mrb[0].mxu0 %v2412
        %v2619 = vpop.f32.mrb[0].mxu0
        %v2620 = vadd.f32 %v1082, %v2619
        %v2621 = vpop.f32.mrb[0].mxu0
        %2622 = vmatprep.mubr.f32.mxu0 0.0
        %2623 = vmatmul.mubr.f32.gmra.mrb[0].mxu0 %v2415
        %v2624 = vpop.f32.mrb[0].mxu0
        %v2625 = vadd.f32 %v1083, %v2624
        %v2626 = vpop.f32.mrb[0].mxu0
        %2627 = vmatprep.mubr.f32.mxu0 0.0
        %2628 = vmatmul.mubr.f32.gmra.mrb[0].mxu0 %v2418
        %v2629 = vpop.f32.mrb[0].mxu0
        %v2630 = vadd.f32 %v1084, %v2629
        %v2631 = vpop.f32.mrb[0].mxu0
        %2632 = vmatprep.mubr.f32.mxu0 0.0
        %2633 = vmatmul.mubr.f32.gmra.mrb[0].mxu0 %v2421
        %v2634 = vpop.f32.mrb[0].mxu0
        %v2635 = vadd.f32 %v1085, %v2634
        %v2636 = vpop.f32.mrb[0].mxu0
        %2637 = vmatprep.mubr.f32.mxu0 0.0
        %2638 = vmatmul.mubr.f32.gmra.mrb[0].mxu0 %v2424
        %v2639 = vpop.f32.mrb[0].mxu0
        %v2640 = vadd.f32 %v1086, %v2639
        %v2641 = vpop.f32.mrb[0].mxu0
        %2642 = vmatprep.mubr.f32.mxu0 0.0
        %2643 = vmatmul.mubr.f32.gmra.mrb[0].mxu0 %v2427
        %v2644 = vpop.f32.mrb[0].mxu0
        %v2645 = vadd.f32 %v1087, %v2644
        %v2646 = vpop.f32.mrb[0].mxu0
        %2647 = vmatprep.mubr.f32.mxu0 0.0
        %2648 = vmatmul.mubr.f32.gmra.mrb[0].mxu0 %v2430
        %v2649 = vpop.f32.mrb[0].mxu0
        %v2650 = vadd.f32 %v1088, %v2649
        %v2651 = vpop.f32.mrb[0].mxu0
        %2652 = vmatprep.mubr.f32.mxu0 0.0
        %2653 = vmatmul.mubr.f32.gmra.mrb[0].mxu0 %v2433
        %v2654 = vpop.f32.mrb[0].mxu0
        %v2655 = vadd.f32 %v1089, %v2654
        %v2656 = vpop.f32.mrb[0].mxu0
        %2657 = vmatprep.mubr.f32.mxu0 0.0
        %2658 = vmatmul.mubr.f32.gmra.mrb[0].mxu0 %v2436
        %v2659 = vpop.f32.mrb[0].mxu0
        %v2660 = vadd.f32 %v1090, %v2659
        %v2661 = vpop.f32.mrb[0].mxu0
        %2662 = vdwg.mxu0
        %2663 = vst [vmem:[%s265] sm:$0xff] %v2505
        %2664 = vst [vmem:[%s265 + $0x8] sm:$0xff] %v2510
        %2665 = vst [vmem:[%s265 + $0x10] sm:$0xff] %v2515
        %2666 = vst [vmem:[%s265 + $0x18] sm:$0xff] %v2520
        %2667 = vst [vmem:[%s265 + $0x20] sm:$0xff] %v2525
        %2668 = vst [vmem:[%s265 + $0x28] sm:$0xff] %v2530
        %2669 = vst [vmem:[%s265 + $0x30] sm:$0xff] %v2535
        %2670 = vst [vmem:[%s265 + $0x38] sm:$0xff] %v2540
        %2671 = vst [vmem:[%s265 + $0x40] sm:$0xff] %v2545
        %2672 = vst [vmem:[%s265 + $0x48] sm:$0xff] %v2550
        %2673 = vst [vmem:[%s265 + $0x50] sm:$0xff] %v2555
        %2674 = vst [vmem:[%s265 + $0x58] sm:$0xff] %v2560
        %2675 = vst [vmem:[%s265 + $0x60] sm:$0xff] %v2565
        %2676 = vst [vmem:[%s265 + $0x68] sm:$0xff] %v2570
        %2677 = vst [vmem:[%s265 + $0x70] sm:$0xff] %v2575
        %2678 = vst [vmem:[%s265 + $0x78] sm:$0xff] %v2580
        %2679 = vst [vmem:[%s265 + $0x80] sm:$0xff] %v2585
        %2680 = vst [vmem:[%s265 + $0x88] sm:$0xff] %v2590
        %2681 = vst [vmem:[%s265 + $0x90] sm:$0xff] %v2595
        %2682 = vst [vmem:[%s265 + $0x98] sm:$0xff] %v2600
        %2683 = vst [vmem:[%s265 + $0xa0] sm:$0xff] %v2605
        %2684 = vst [vmem:[%s265 + $0xa8] sm:$0xff] %v2610
        %2685 = vst [vmem:[%s265 + $0xb0] sm:$0xff] %v2615
        %2686 = vst [vmem:[%s265 + $0xb8] sm:$0xff] %v2620
        %2687 = vst [vmem:[%s265 + $0xc0] sm:$0xff] %v2625
        %2688 = vst [vmem:[%s265 + $0xc8] sm:$0xff] %v2630
        %2689 = vst [vmem:[%s265 + $0xd0] sm:$0xff] %v2635
        %2690 = vst [vmem:[%s265 + $0xd8] sm:$0xff] %v2640
        %2691 = vst [vmem:[%s265 + $0xe0] sm:$0xff] %v2645
        %2692 = vst [vmem:[%s265 + $0xe8] sm:$0xff] %v2650
        %2693 = vst [vmem:[%s265 + $0xf0] sm:$0xff] %v2655
        %2694 = vst [vmem:[%s265 + $0xf8] sm:$0xff] %v2660
        %s2695 = sand.u32 %s163, 1
        %s2696 = scalar_lea.sflag [#allocation6], %s2695
        %s2697 = sand.u32 %s163, 1
        %s2698 = smul.addr %s2697, 256
        %s2699 = scalar_lea.vmem [#allocation7], %s2698
        // Predicated region
        $region49: #{tpu_custom_call.1} parent=39 // pred_check
          %p2700 = pneg %p173
        $region50: #{tpu_custom_call.1} parent=39 // pred_check_branch
          %2702 = sbr.rel (%p2700) target = $region52
        $region51: #{tpu_custom_call.1} parent=39 // pred_region
          %s2703 = sadd.s32 %s28, %s29
          %s2704 = smul.u32 32, %s2703
          %s2706 = ssub.s32 4096, 4096
          %2707 = vsyncadd %s2696, %s2706
          %s2708 = smul.addr %s27, 32
          %s2709 = sadd.s32 %s2704, %s2708
          %s2710 = smul.addr %s2709, 128
          %s2711 = scalar_lea.hbm %s5, %s2710
          %s2712 = sshll.u32 %s2699, 4
          %s2713 = int_to_ptr.vmem [resolvable:$true] %s2712
          %2718 = dma.vmem_to_hbm [thread:$0]  %s2713, 4096, %s2711, %s2696, 128, 128, 8
        $region52: #{tpu_custom_call.1} parent=39 // pred_fallthru
          _
      $region40: #{tpu_custom_call.1} parent=5 // pred_fallthru
        _
      %p2719 = scmp.le.s32.totalorder 2, %s17
      // Predicated region
      $region53: #{tpu_custom_call.1} parent=5 // pred_check
        %p2720 = pneg %p2719
      $region54: #{tpu_custom_call.1} parent=5 // pred_check_branch
        %2722 = sbr.rel (%p2720) target = $region56
      $region55: #{tpu_custom_call.1} parent=5 // pred_region
        %s2723 = ssub.s32 %s17, 2
        // Predicated region
        $region57: #{tpu_custom_call.1} parent=55 // pred_check
          %p2724 = pneg %p179
        $region58: #{tpu_custom_call.1} parent=55 // pred_check_branch
          %2726 = sbr.rel (%p2724) target = $region60
        $region59: #{tpu_custom_call.1} parent=55 // pred_region
          %s2727 = sand.u32 %s164, 1
          %s2728 = scalar_lea.sflag [#allocation6], %s2727
          %s2729 = sand.u32 %s164, 1
          %s2730 = smul.addr %s2729, 256
          %s2731 = scalar_lea.vmem [#allocation7], %s2730
          %2732 = dma.done %s2728, 4096
        $region60: #{tpu_custom_call.1} parent=55 // pred_fallthru
          _
      $region56: #{tpu_custom_call.1} parent=5 // pred_fallthru
        _
    $region6: #{tpu_custom_call.1} parent=1 // loop_footer
      %s21 = sadd.s32 1, %s17
    $region7: #{tpu_custom_call.1} parent=1 // loop_footer_branch
      %16 = sbr.rel target = $region3
    $region8: #{tpu_custom_call.1} parent=1 // loop_exit
      _
    %2733 = vsyncpa [#allocation5], 1
    %s2734 = scalar_lea.sflag [#allocation5], 1
    %2735 = vsyncpa %s2734, 1
    %2736 = vsyncpa [#allocation6], 1
    %s2737 = scalar_lea.sflag [#allocation6], 1
    %2738 = vsyncpa %s2737, 1

</llo_original>
